<compile_context>
chip_gen: v5e
topology: v5e:2x2
jax: 0.10.0
libtpu: 0.0.40
codegen_flags: <defaults>
</compile_context>

<pallas_src>
import jax
import jax.numpy as jnp
import numpy as np
from jax.experimental import pallas as pl
from jax.experimental.pallas import tpu as pltpu


def _round_up(x, m):
    return ((x + m - 1) // m) * m


def _edge_model_kernel(x_ref, h_ref, w1_ref, gb_ref, wih_ref, whh_ref,
                       gbias_ref, wx_ref, bx_ref, out_ref):
    f32 = jnp.float32
    h2 = h_ref.shape[1]
    mm = wih_ref.dtype                        # matmul operand dtype (bf16/f32)

    # --- mlp1 Linear: one fused dot (x carries one_hot(batch) and a 1s col,
    #     the weight carries u @ W1_u and b1) -------------------------------
    z = jnp.dot(x_ref[...], w1_ref[...], preferred_element_type=f32)

    # --- LayerNorm (f32, biased var, eps=1e-5) + ReLU ----------------------
    mu = jnp.mean(z, axis=-1, keepdims=True)
    var = jnp.mean((z - mu) ** 2, axis=-1, keepdims=True)
    zn = (z - mu) * jax.lax.rsqrt(var + 1e-5)
    a = jnp.maximum(zn * gb_ref[0:1, :] + gb_ref[1:2, :], 0.0)

    # --- GRU cell, single step, PyTorch gate order (r, z, n) ---------------
    # Fused per side: N = 3*h2 <= 128 lanes -> one weight tile per dot.
    h_f32 = h_ref[...]                        # h streamed in f32
    gi = jnp.dot(a.astype(mm), wih_ref[...], preferred_element_type=f32)
    gh = jnp.dot(h_f32.astype(mm), whh_ref[...], preferred_element_type=f32)

    b_rz = gbias_ref[:, :2 * h2]              # (bih + bhh) for r,z, pre-folded
    b_in = gbias_ref[:, 2 * h2:3 * h2]        # b_ih for n
    b_hn = gbias_ref[:, 3 * h2:]              # b_hh for n

    rz = jax.nn.sigmoid(gi[:, :2 * h2] + gh[:, :2 * h2] + b_rz)
    r = rz[:, :h2]
    zg = rz[:, h2:]
    n = jnp.tanh(gi[:, 2 * h2:] + b_in + r * (gh[:, 2 * h2:] + b_hn))
    h_new = zg * (h_f32 - n) + n              # == (1 - z) * n + z * h

    # --- mlp_x Linear; outputs packed as a single block [out | h_new] ------
    out = (jnp.dot(h_new.astype(mm), wx_ref[...], preferred_element_type=f32)
           + bx_ref[...])
    out_ref[...] = jnp.concatenate([out, h_new], axis=-1).astype(out_ref.dtype)


def uncond_recurrent_edge_model(src, dest, edge_attr, h, u, batch, winding,
                                params, *, tile_e=4096, io_dtype=jnp.bfloat16):
    """JAX/Pallas equivalent of UnconditionedRecurrentEdgeModel.forward."""
    del winding  # unused by the forward of the unconditioned variant

    f32 = jnp.float32
    E, n_inc = src.shape
    e_inc = edge_attr.shape[1]
    u_inc = u.shape[1]
    B = u.shape[0]
    h2 = h.shape[1]
    h1 = params["w1"].shape[1]
    e_outc = params["wx"].shape[1]
    split = 2 * n_inc + e_inc

    # --- fused mlp1 input / weight (single MXU dot in-kernel) --------------
    onehot = jax.nn.one_hot(batch, B, dtype=f32)
    x = jnp.concatenate(
        [src, dest, edge_attr, onehot, jnp.ones((E, 1), f32)], axis=1
    ).astype(io_dtype)
    kx = x.shape[1]                               # 2*n_inc + e_inc + B + 1

    w1 = params["w1"].astype(f32)                 # [dim_in, h1]
    uw = u.astype(f32) @ w1[split:split + u_inc]  # (B, h1): u @ W1_u, hoisted
    w1_fused = jnp.concatenate(
        [w1[:split], uw, params["b1"].astype(f32).reshape(1, h1)], axis=0
    ).astype(io_dtype)                            # [kx, h1]

    gb = jnp.concatenate([params["gamma"].reshape(1, h1),
                          params["beta"].reshape(1, h1)], axis=0).astype(f32)

    # --- GRU weights [in, 3*h2], gate order (r,z,n); r/z biases pre-folded --
    wih = params["wih"].astype(io_dtype)
    whh = params["whh"].astype(io_dtype)
    bih = params["bih"].astype(f32).reshape(1, 3 * h2)
    bhh = params["bhh"].astype(f32).reshape(1, 3 * h2)
    gru_b = jnp.concatenate(
        [bih[:, :2 * h2] + bhh[:, :2 * h2], bih[:, 2 * h2:], bhh[:, 2 * h2:]],
        axis=1)                                   # [1, 4*h2]

    wx = params["wx"].astype(io_dtype)
    bx = params["bx"].astype(f32).reshape(1, e_outc)

    # --- edge tiling: big 16-aligned tiles, but keep grid >= 2 so the
    #     "parallel" axis can shard across TensorCores on megacore/v7x -------
    E16 = _round_up(max(E, 1), 16)
    tile = max(16, min(_round_up(tile_e, 16), E16))
    if E16 >= 32:
        tile = min(tile, _round_up((E16 + 1) // 2, 16))
    E_pad = _round_up(E, tile)
    grid = E_pad // tile

    def pad_rows(a):
        return a if E_pad == E else jnp.pad(a, ((0, E_pad - E), (0, 0)))

    # NOTE: padded rows are all-zero (incl. the one-hot / ones columns); they
    # produce finite garbage and are sliced off below — never alias outputs.
    x_p = pad_rows(x)
    h_p = pad_rows(h.astype(f32))

    resident = [w1_fused, gb, wih, whh, gru_b, wx, bx]

    def edge_spec(d):
        return pl.BlockSpec((tile, d), lambda i: (i, 0))

    def full_spec(a):
        return pl.BlockSpec(a.shape, lambda i: (0, 0))

    in_specs = [edge_spec(kx), edge_spec(h2)] + [full_spec(a) for a in resident]
    out_specs = edge_spec(e_outc + h2)
    out_shape = jax.ShapeDtypeStruct((E_pad, e_outc + h2), f32)

    io_b = jnp.dtype(io_dtype).itemsize
    weight_bytes = sum(int(np.prod(a.shape)) * a.dtype.itemsize for a in resident)
    cost = pl.CostEstimate(
        flops=int(2 * E_pad * (kx * h1 + 3 * h1 * h2 + 3 * h2 * h2 + h2 * e_outc)),
        transcendentals=int(5 * E_pad * h2),    # 2 sigmoids (~2 EUP ops) + tanh
        bytes_accessed=int(E_pad * (kx * io_b + h2 * 4 + (e_outc + h2) * 4)
                           + weight_bytes),
    )

    comb = pl.pallas_call(
        _edge_model_kernel,
        out_shape=out_shape,
        grid_spec=pltpu.PrefetchScalarGridSpec(
            num_scalar_prefetch=0,
            grid=(grid,),
            in_specs=in_specs,
            out_specs=out_specs,
        ),
        compiler_params=pltpu.CompilerParams(
            dimension_semantics=("parallel",)),
        cost_estimate=cost,
    )(x_p, h_p, *resident)

    return comb[:E, :e_outc], comb[:E, e_outc:]


def init_params(key, dim_in, h1, h2, e_outc):
    """Deterministic PyTorch-style init (uniform(-1/sqrt(fan_in), 1/sqrt(fan_in)))."""
    ks = jax.random.split(key, 8)

    def unif(k, shape, fan_in):
        b = 1.0 / np.sqrt(fan_in)
        return jax.random.uniform(k, shape, jnp.float32, -b, b)

    return {
        # mlp1 Linear(dim_in, h1): stored transposed as [in, out]
        "w1": unif(ks[0], (dim_in, h1), dim_in),
        "b1": unif(ks[1], (1, h1), dim_in),
        # LayerNorm(h1)
        "gamma": jnp.ones((1, h1), jnp.float32),
        "beta": jnp.zeros((1, h1), jnp.float32),
        # GRU(h1 -> h2): transposed [h1, 3*h2] / [h2, 3*h2], gate order (r,z,n)
        "wih": unif(ks[2], (h1, 3 * h2), h2),
        "whh": unif(ks[3], (h2, 3 * h2), h2),
        "bih": unif(ks[4], (1, 3 * h2), h2),
        "bhh": unif(ks[5], (1, 3 * h2), h2),
        # mlp_x Linear(h2, e_outc)
        "wx": unif(ks[6], (h2, e_outc), h2),
        "bx": unif(ks[7], (1, e_outc), h2),
    }


def reference_forward(src, dest, edge_attr, h, u, batch, params):
    """Pure-JAX reference of the PyTorch forward, for correctness checking."""
    x = jnp.concatenate([src, dest, edge_attr, u[batch]], axis=1)
    z = x @ params["w1"] + params["b1"]
    mu = z.mean(-1, keepdims=True)
    var = ((z - mu) ** 2).mean(-1, keepdims=True)
    a = jnp.maximum((z - mu) / jnp.sqrt(var + 1e-5) * params["gamma"] + params["beta"], 0.0)
    gi = a @ params["wih"] + params["bih"]
    gh = h @ params["whh"] + params["bhh"]
    h2 = h.shape[-1]
    r = jax.nn.sigmoid(gi[:, :h2] + gh[:, :h2])
    zg = jax.nn.sigmoid(gi[:, h2:2 * h2] + gh[:, h2:2 * h2])
    n = jnp.tanh(gi[:, 2 * h2:] + r * gh[:, 2 * h2:])
    hn = (1.0 - zg) * n + zg * h
    return hn @ params["wx"] + params["bx"], hn


if __name__ == "__main__":
    # Small config consistent with the module's __init__.
    config = {
        "n_inc": 8,
        "e_inc": 8,
        "u_inc": 8,
        "w_inc": 4,   # unused by the unconditioned variant
        "e_outc": 16,
        "edge_model_mlp1_hidden_sizes": [32, 32],
    }
    E, B = 250, 3          # E not a tile multiple -> exercises padding path
    n_inc, e_inc, u_inc = config["n_inc"], config["e_inc"], config["u_inc"]
    h1, h2 = config["edge_model_mlp1_hidden_sizes"]
    e_outc = config["e_outc"]
    dim_in = e_inc + 2 * n_inc + u_inc  # = 32

    key = jax.random.PRNGKey(0)
    k_src, k_dst, k_e, k_h, k_u, k_b, k_w, k_p = jax.random.split(key, 8)

    src = jax.random.normal(k_src, (E, n_inc), jnp.float32)
    dest = jax.random.normal(k_dst, (E, n_inc), jnp.float32)
    edge_attr = jax.random.normal(k_e, (E, e_inc), jnp.float32)
    h = jax.random.normal(k_h, (E, h2), jnp.float32)
    u = jax.random.normal(k_u, (B, u_inc), jnp.float32)
    batch = jax.random.randint(k_b, (E,), 0, B, jnp.int32)
    winding = jax.random.randint(k_w, (E,), 0, 2, jnp.int32)

    params = init_params(k_p, dim_in, h1, h2, e_outc)
    ref_out, ref_h = reference_forward(src, dest, edge_attr, h, u, batch, params)

    # f32 streaming path (multi-step grid): tight numerical check.
    out32, h32 = uncond_recurrent_edge_model(src, dest, edge_attr, h, u, batch,
                                             winding, params,
                                             tile_e=128, io_dtype=jnp.float32)
    jax.block_until_ready((out32, h32))
    np.testing.assert_allclose(np.asarray(out32), np.asarray(ref_out), rtol=1e-3, atol=1e-3)
    np.testing.assert_allclose(np.asarray(h32), np.asarray(ref_h), rtol=1e-3, atol=1e-3)

    # Default bf16-operand streaming path (large tile): loose check vs f32 ref.
    out_bf, h_bf = uncond_recurrent_edge_model(src, dest, edge_attr, h, u, batch,
                                               winding, params)
    jax.block_until_ready((out_bf, h_bf))
    np.testing.assert_allclose(np.asarray(out_bf), np.asarray(ref_out),
                               rtol=1e-1, atol=7e-2)
    np.testing.assert_allclose(np.asarray(h_bf), np.asarray(ref_h),
                               rtol=1e-1, atol=7e-2)

    assert out_bf.shape == (E, e_outc) and h_bf.shape == (E, h2)
    print("KERNEL_OK")
</pallas_src>

<mosaic_0001>
module attributes {stable_mosaic.version = 11 : i64} {
  func.func @_edge_model_kernel(%arg0: i32, %arg1: memref<128x28xf32, #tpu.memory_space<vmem>>, %arg2: memref<128x32xf32, #tpu.memory_space<vmem>>, %arg3: memref<28x32xf32, #tpu.memory_space<vmem>>, %arg4: memref<2x32xf32, #tpu.memory_space<vmem>>, %arg5: memref<32x96xf32, #tpu.memory_space<vmem>>, %arg6: memref<32x96xf32, #tpu.memory_space<vmem>>, %arg7: memref<1x128xf32, #tpu.memory_space<vmem>>, %arg8: memref<32x16xf32, #tpu.memory_space<vmem>>, %arg9: memref<1x16xf32, #tpu.memory_space<vmem>>, %arg10: memref<128x48xf32, #tpu.memory_space<vmem>>) attributes {dimension_semantics = [#tpu.dimension_semantics<parallel>], iteration_bounds = array<i64: 2>, scalar_prefetch = 0 : i64, scratch_operands = 0 : i64, tpu.core_type = #tpu.core_type<tc>, window_params = [{transform_indices = @transform_0, window_bounds = array<i64: 128, 28>}, {transform_indices = @transform_1, window_bounds = array<i64: 128, 32>}, {pipeline_mode = #tpu.pipeline_mode<synchronous>, transform_indices = @transform_2, window_bounds = array<i64: 28, 32>}, {pipeline_mode = #tpu.pipeline_mode<synchronous>, transform_indices = @transform_3, window_bounds = array<i64: 2, 32>}, {pipeline_mode = #tpu.pipeline_mode<synchronous>, transform_indices = @transform_4, window_bounds = array<i64: 32, 96>}, {pipeline_mode = #tpu.pipeline_mode<synchronous>, transform_indices = @transform_5, window_bounds = array<i64: 32, 96>}, {pipeline_mode = #tpu.pipeline_mode<synchronous>, transform_indices = @transform_6, window_bounds = array<i64: 1, 128>}, {pipeline_mode = #tpu.pipeline_mode<synchronous>, transform_indices = @transform_7, window_bounds = array<i64: 32, 16>}, {pipeline_mode = #tpu.pipeline_mode<synchronous>, transform_indices = @transform_8, window_bounds = array<i64: 1, 16>}, {transform_indices = @transform_9, window_bounds = array<i64: 128, 48>}]} {
    %c0 = arith.constant 0 : index
    %c0_0 = arith.constant 0 : index
    %0 = vector.load %arg1[%c0, %c0_0] : memref<128x28xf32, #tpu.memory_space<vmem>>, vector<128x28xf32>
    %c0_1 = arith.constant 0 : index
    %c0_2 = arith.constant 0 : index
    %1 = vector.load %arg3[%c0_1, %c0_2] : memref<28x32xf32, #tpu.memory_space<vmem>>, vector<28x32xf32>
    %cst = arith.constant dense<0.000000e+00> : vector<128x32xf32>
    %2 = tpu.matmul %0, %1, %cst {dimension_numbers = #tpu.dot_dimension_numbers<[1], [0], [0], [1], [0, 0, 1, 1], [], []>} : vector<128x28xf32>, vector<28x32xf32>, vector<128x32xf32> -> vector<128x32xf32>
    %cst_3 = arith.constant dense<0.000000e+00> : vector<128xf32>
    %3 = vector.multi_reduction <add>, %2, %cst_3 [1] : vector<128x32xf32> to vector<128xf32>
    %4 = vector.shape_cast %3 : vector<128xf32> to vector<128x1xf32>
    %cst_4 = arith.constant 3.200000e+01 : f32
    %5 = vector.broadcast %cst_4 : f32 to vector<128x1xf32>
    %6 = arith.divf %4, %5 : vector<128x1xf32>
    %7 = vector.broadcast %6 : vector<128x1xf32> to vector<128x32xf32>
    %8 = arith.subf %2, %7 : vector<128x32xf32>
    %9 = arith.mulf %8, %8 : vector<128x32xf32>
    %cst_5 = arith.constant dense<0.000000e+00> : vector<128xf32>
    %10 = vector.multi_reduction <add>, %9, %cst_5 [1] : vector<128x32xf32> to vector<128xf32>
    %11 = vector.shape_cast %10 : vector<128xf32> to vector<128x1xf32>
    %cst_6 = arith.constant 3.200000e+01 : f32
    %12 = vector.broadcast %cst_6 : f32 to vector<128x1xf32>
    %13 = arith.divf %11, %12 : vector<128x1xf32>
    %14 = vector.broadcast %6 : vector<128x1xf32> to vector<128x32xf32>
    %15 = arith.subf %2, %14 : vector<128x32xf32>
    %cst_7 = arith.constant 9.99999974E-6 : f32
    %16 = vector.broadcast %cst_7 : f32 to vector<128x1xf32>
    %17 = arith.addf %13, %16 : vector<128x1xf32>
    %18 = math.rsqrt %17 : vector<128x1xf32>
    %19 = vector.broadcast %18 : vector<128x1xf32> to vector<128x32xf32>
    %20 = arith.mulf %15, %19 : vector<128x32xf32>
    %c0_8 = arith.constant 0 : index
    %c0_9 = arith.constant 0 : index
    %21 = vector.load %arg4[%c0_8, %c0_9] : memref<2x32xf32, #tpu.memory_space<vmem>>, vector<1x32xf32>
    %22 = vector.broadcast %21 : vector<1x32xf32> to vector<128x32xf32>
    %23 = arith.mulf %20, %22 : vector<128x32xf32>
    %c1 = arith.constant 1 : index
    %c0_10 = arith.constant 0 : index
    %24 = vector.load %arg4[%c1, %c0_10] : memref<2x32xf32, #tpu.memory_space<vmem>>, vector<1x32xf32>
    %25 = vector.broadcast %24 : vector<1x32xf32> to vector<128x32xf32>
    %26 = arith.addf %23, %25 : vector<128x32xf32>
    %cst_11 = arith.constant 0.000000e+00 : f32
    %27 = vector.broadcast %cst_11 : f32 to vector<128x32xf32>
    %28 = arith.maximumf %26, %27 : vector<128x32xf32>
    %c0_12 = arith.constant 0 : index
    %c0_13 = arith.constant 0 : index
    %29 = vector.load %arg2[%c0_12, %c0_13] : memref<128x32xf32, #tpu.memory_space<vmem>>, vector<128x32xf32>
    %c0_14 = arith.constant 0 : index
    %c0_15 = arith.constant 0 : index
    %30 = vector.load %arg5[%c0_14, %c0_15] : memref<32x96xf32, #tpu.memory_space<vmem>>, vector<32x96xf32>
    %cst_16 = arith.constant dense<0.000000e+00> : vector<128x96xf32>
    %31 = tpu.matmul %28, %30, %cst_16 {dimension_numbers = #tpu.dot_dimension_numbers<[1], [0], [0], [1], [0, 0, 1, 1], [], []>} : vector<128x32xf32>, vector<32x96xf32>, vector<128x96xf32> -> vector<128x96xf32>
    %c0_17 = arith.constant 0 : index
    %c0_18 = arith.constant 0 : index
    %32 = vector.load %arg6[%c0_17, %c0_18] : memref<32x96xf32, #tpu.memory_space<vmem>>, vector<32x96xf32>
    %cst_19 = arith.constant dense<0.000000e+00> : vector<128x96xf32>
    %33 = tpu.matmul %29, %32, %cst_19 {dimension_numbers = #tpu.dot_dimension_numbers<[1], [0], [0], [1], [0, 0, 1, 1], [], []>} : vector<128x32xf32>, vector<32x96xf32>, vector<128x96xf32> -> vector<128x96xf32>
    %c0_20 = arith.constant 0 : index
    %c0_21 = arith.constant 0 : index
    %34 = vector.load %arg7[%c0_20, %c0_21] : memref<1x128xf32, #tpu.memory_space<vmem>>, vector<1x64xf32>
    %c0_22 = arith.constant 0 : index
    %c64 = arith.constant 64 : index
    %35 = vector.load %arg7[%c0_22, %c64] : memref<1x128xf32, #tpu.memory_space<vmem>>, vector<1x32xf32>
    %c0_23 = arith.constant 0 : index
    %c96 = arith.constant 96 : index
    %36 = vector.load %arg7[%c0_23, %c96] : memref<1x128xf32, #tpu.memory_space<vmem>>, vector<1x32xf32>
    %37 = vector.extract_strided_slice %31 {offsets = [0, 0], sizes = [128, 64], strides = [1, 1]} : vector<128x96xf32> to vector<128x64xf32>
    %38 = vector.extract_strided_slice %33 {offsets = [0, 0], sizes = [128, 64], strides = [1, 1]} : vector<128x96xf32> to vector<128x64xf32>
    %39 = arith.addf %37, %38 : vector<128x64xf32>
    %40 = vector.broadcast %34 : vector<1x64xf32> to vector<128x64xf32>
    %41 = arith.addf %39, %40 : vector<128x64xf32>
    %42 = arith.negf %41 : vector<128x64xf32>
    %43 = math.exp %42 : vector<128x64xf32>
    %cst_24 = arith.constant 1.000000e+00 : f32
    %44 = vector.broadcast %cst_24 : f32 to vector<128x64xf32>
    %45 = arith.addf %44, %43 : vector<128x64xf32>
    %46 = arith.divf %44, %45 : vector<128x64xf32>
    %47 = vector.extract_strided_slice %46 {offsets = [0, 0], sizes = [128, 32], strides = [1, 1]} : vector<128x64xf32> to vector<128x32xf32>
    %48 = vector.extract_strided_slice %46 {offsets = [0, 32], sizes = [128, 32], strides = [1, 1]} : vector<128x64xf32> to vector<128x32xf32>
    %49 = vector.extract_strided_slice %31 {offsets = [0, 64], sizes = [128, 32], strides = [1, 1]} : vector<128x96xf32> to vector<128x32xf32>
    %50 = vector.broadcast %35 : vector<1x32xf32> to vector<128x32xf32>
    %51 = arith.addf %49, %50 : vector<128x32xf32>
    %52 = vector.extract_strided_slice %33 {offsets = [0, 64], sizes = [128, 32], strides = [1, 1]} : vector<128x96xf32> to vector<128x32xf32>
    %53 = vector.broadcast %36 : vector<1x32xf32> to vector<128x32xf32>
    %54 = arith.addf %52, %53 : vector<128x32xf32>
    %55 = arith.mulf %47, %54 : vector<128x32xf32>
    %56 = arith.addf %51, %55 : vector<128x32xf32>
    %57 = math.tanh %56 : vector<128x32xf32>
    %58 = arith.subf %29, %57 : vector<128x32xf32>
    %59 = arith.mulf %48, %58 : vector<128x32xf32>
    %60 = arith.addf %59, %57 : vector<128x32xf32>
    %c0_25 = arith.constant 0 : index
    %c0_26 = arith.constant 0 : index
    %61 = vector.load %arg8[%c0_25, %c0_26] : memref<32x16xf32, #tpu.memory_space<vmem>>, vector<32x16xf32>
    %cst_27 = arith.constant dense<0.000000e+00> : vector<128x16xf32>
    %62 = tpu.matmul %60, %61, %cst_27 {dimension_numbers = #tpu.dot_dimension_numbers<[1], [0], [0], [1], [0, 0, 1, 1], [], []>} : vector<128x32xf32>, vector<32x16xf32>, vector<128x16xf32> -> vector<128x16xf32>
    %c0_28 = arith.constant 0 : index
    %c0_29 = arith.constant 0 : index
    %63 = vector.load %arg9[%c0_28, %c0_29] : memref<1x16xf32, #tpu.memory_space<vmem>>, vector<1x16xf32>
    %64 = vector.broadcast %63 : vector<1x16xf32> to vector<128x16xf32>
    %65 = arith.addf %62, %64 : vector<128x16xf32>
    %66 = tpu.concatenate %65, %60 in 1 : vector<128x16xf32>, vector<128x32xf32> -> vector<128x48xf32>
    %c0_30 = arith.constant 0 : index
    %c0_31 = arith.constant 0 : index
    %67 = vector.load %arg10[%c0_30, %c0_31] : memref<128x48xf32, #tpu.memory_space<vmem>>, vector<128x48xf32>
    tpu.vector_store %arg10[%c0_30, %c0_31], %66 {strides = array<i32>} : memref<128x48xf32, #tpu.memory_space<vmem>>, vector<128x48xf32>,
    return
  }
  func.func @transform_0(%arg0: i32) -> (i32, i32) {
    %c0_i32 = arith.constant 0 : i32
    %c0_i32_0 = arith.constant 0 : i32
    return %arg0, %c0_i32 : i32, i32
  }
  func.func @transform_1(%arg0: i32) -> (i32, i32) {
    %c0_i32 = arith.constant 0 : i32
    %c0_i32_0 = arith.constant 0 : i32
    return %arg0, %c0_i32 : i32, i32
  }
  func.func @transform_2(%arg0: i32) -> (i32, i32) {
    %c0_i32 = arith.constant 0 : i32
    %c0_i32_0 = arith.constant 0 : i32
    %c0_i32_1 = arith.constant 0 : i32
    return %c0_i32, %c0_i32_0 : i32, i32
  }
  func.func @transform_3(%arg0: i32) -> (i32, i32) {
    %c0_i32 = arith.constant 0 : i32
    %c0_i32_0 = arith.constant 0 : i32
    %c0_i32_1 = arith.constant 0 : i32
    return %c0_i32, %c0_i32_0 : i32, i32
  }
  func.func @transform_4(%arg0: i32) -> (i32, i32) {
    %c0_i32 = arith.constant 0 : i32
    %c0_i32_0 = arith.constant 0 : i32
    %c0_i32_1 = arith.constant 0 : i32
    return %c0_i32, %c0_i32_0 : i32, i32
  }
  func.func @transform_5(%arg0: i32) -> (i32, i32) {
    %c0_i32 = arith.constant 0 : i32
    %c0_i32_0 = arith.constant 0 : i32
    %c0_i32_1 = arith.constant 0 : i32
    return %c0_i32, %c0_i32_0 : i32, i32
  }
  func.func @transform_6(%arg0: i32) -> (i32, i32) {
    %c0_i32 = arith.constant 0 : i32
    %c0_i32_0 = arith.constant 0 : i32
    %c0_i32_1 = arith.constant 0 : i32
    return %c0_i32, %c0_i32_0 : i32, i32
  }
  func.func @transform_7(%arg0: i32) -> (i32, i32) {
    %c0_i32 = arith.constant 0 : i32
    %c0_i32_0 = arith.constant 0 : i32
    %c0_i32_1 = arith.constant 0 : i32
    return %c0_i32, %c0_i32_0 : i32, i32
  }
  func.func @transform_8(%arg0: i32) -> (i32, i32) {
    %c0_i32 = arith.constant 0 : i32
    %c0_i32_0 = arith.constant 0 : i32
    %c0_i32_1 = arith.constant 0 : i32
    return %c0_i32, %c0_i32_0 : i32, i32
  }
  func.func @transform_9(%arg0: i32) -> (i32, i32) {
    %c0_i32 = arith.constant 0 : i32
    %c0_i32_0 = arith.constant 0 : i32
    return %arg0, %c0_i32 : i32, i32
  }
}

</mosaic_0001>

<llo_original>
// kernel: tpu_custom_call.1
$region0: #{tpu_custom_call.1}
  #allocation0 [shape = 'u32[]', space=smem, size = 0x4, offset = 0x4, fixed_abs, tag = 'smem constant byte address 0x4 - core index']
  #allocation1 [shape = 'u32[72,128]{1,0:T(1,128)}', space=vmem, size = 0x9000, scoped, tag = 'internal scratch']
  %s0 = inlined_call_operand.vmem [shape: f32[256,28], index: 0, kind: input, shape index: {}]
  %s1 = inlined_call_operand.vmem [shape: f32[256,32], index: 1, kind: input, shape index: {}]
  %s2 = inlined_call_operand.vmem [shape: f32[28,32], index: 2, kind: input, shape index: {}]
  %s3 = inlined_call_operand.vmem [shape: f32[2,32], index: 3, kind: input, shape index: {}]
  %s4 = inlined_call_operand.vmem [shape: f32[32,96], index: 4, kind: input, shape index: {}]
  %s5 = inlined_call_operand.vmem [shape: f32[32,96], index: 5, kind: input, shape index: {}]
  %s6 = inlined_call_operand.vmem [shape: f32[1,128], index: 6, kind: input, shape index: {}]
  %s7 = inlined_call_operand.vmem [shape: f32[32,16], index: 7, kind: input, shape index: {}]
  %s8 = inlined_call_operand.vmem [shape: f32[1,16], index: 8, kind: input, shape index: {}]
  %s9 = inlined_call_operand.vmem [shape: f32[256,48], index: 9, kind: output, shape index: {}]
  %s10 = sld [smem:[#allocation0]]
  $region69: #{tpu_custom_call.1} parent=0
    _
  %s12 = ssub.s32 1, %s10
  %s13 = scalar_select 0, %s12, %s10
  loop: start=0, step=1, limit=4
  $region2: #{tpu_custom_call.1} parent=0 // loop_pre_header
    _
  $region3: #{tpu_custom_call.1} parent=0 // loop_header
    %s15 = sphi 0, %s19
    %p16 = scmp.ge.s32.totalorder %s15, 4
    %s25 = sphi 0, %s27
    %s28 = sphi 0, %s25
    %s29 = sphi 0, %s28
    %s45 = sphi 0, %s29
    %s51 = sphi 0, %s53
    %s54 = sphi 0, %s51
    %s55 = sphi 0, %s54
    %s71 = sphi 0, %s55
    %s75 = sphi 0, %s75
    %s77 = sphi 0, %s75
    %s78 = sphi 0, %s77
    %s92 = sphi 0, %s78
    %s96 = sphi 0, %s96
    %s98 = sphi 0, %s96
    %s99 = sphi 0, %s98
    %s113 = sphi 0, %s99
    %s117 = sphi 0, %s117
    %s119 = sphi 0, %s117
    %s120 = sphi 0, %s119
    %s134 = sphi 0, %s120
    %s138 = sphi 0, %s138
    %s140 = sphi 0, %s138
    %s141 = sphi 0, %s140
    %s155 = sphi 0, %s141
    %s159 = sphi 0, %s159
    %s161 = sphi 0, %s159
    %s162 = sphi 0, %s161
    %s176 = sphi 0, %s162
    %s180 = sphi 0, %s180
    %s182 = sphi 0, %s180
    %s183 = sphi 0, %s182
    %s197 = sphi 0, %s183
    %s201 = sphi 0, %s201
    %s203 = sphi 0, %s201
    %s204 = sphi 0, %s203
    %s218 = sphi 0, %s204
    %s224 = sphi 0, %s226
    %s227 = sphi 0, %s224
    %s228 = sphi 0, %s227
    %s244 = sphi 0, %s228
  $region4: #{tpu_custom_call.1} parent=0 // loop_header_branch
    %18 = sbr.rel (%p16) target = $region8
  $region5: #{tpu_custom_call.1} parent=0 // loop_body
    %s20 = ssub.s32 %s15, 1
    %s21 = ssub.s32 %s15, 2
    %s22 = sadd.s32 %s15, 1
    %s23 = ssub.s32 %s15, %s22
    %p24 = scmp.eq.s32.totalorder %s23, 0
    %s26 = sadd.s32 %s25, 1
    %s27 = scalar_select %p24, %s25, %s26
    %p30 = pneg %p24
    %p31 = scmp.eq.s32.totalorder %s15, 1
    %p32 = por %p30, %p31
    %p33 = scmp.ne.s32.totalorder %s25, %s28
    %p34 = scmp.eq.s32.totalorder %s15, 0
    %p35 = por %p33, %p34
    %p36 = scmp.ne.s32.totalorder %s25, %s28
    %p37 = scmp.eq.s32.totalorder %s20, 1
    %p38 = por %p36, %p37
    %p39 = scmp.ne.s32.totalorder %s28, %s29
    %p40 = scmp.eq.s32.totalorder %s20, 0
    %p41 = por %p39, %p40
    %p42 = scmp.ne.s32.totalorder %s28, %s29
    %p43 = scmp.eq.s32.totalorder %s21, 1
    %p44 = por %p42, %p43
    %p46 = scmp.ne.s32.totalorder %s29, %s45
    %p47 = scmp.eq.s32.totalorder %s21, 0
    %p48 = por %p46, %p47
    %s49 = ssub.s32 %s15, %s22
    %p50 = scmp.eq.s32.totalorder %s49, 0
    %s52 = sadd.s32 %s51, 1
    %s53 = scalar_select %p50, %s51, %s52
    %p56 = pneg %p50
    %p57 = scmp.eq.s32.totalorder %s15, 1
    %p58 = por %p56, %p57
    %p59 = scmp.ne.s32.totalorder %s51, %s54
    %p60 = scmp.eq.s32.totalorder %s15, 0
    %p61 = por %p59, %p60
    %p62 = scmp.ne.s32.totalorder %s51, %s54
    %p63 = scmp.eq.s32.totalorder %s20, 1
    %p64 = por %p62, %p63
    %p65 = scmp.ne.s32.totalorder %s54, %s55
    %p66 = scmp.eq.s32.totalorder %s20, 0
    %p67 = por %p65, %p66
    %p68 = scmp.ne.s32.totalorder %s54, %s55
    %p69 = scmp.eq.s32.totalorder %s21, 1
    %p70 = por %p68, %p69
    %p72 = scmp.ne.s32.totalorder %s55, %s71
    %p73 = scmp.eq.s32.totalorder %s21, 0
    %p74 = por %p72, %p73
    %s76 = sadd.s32 %s75, 1
    %p79 = scmp.eq.s32.totalorder %s15, 1
    %p80 = scmp.ne.s32.totalorder %s75, %s77
    %p81 = scmp.eq.s32.totalorder %s15, 0
    %p82 = por %p80, %p81
    %p83 = scmp.ne.s32.totalorder %s75, %s77
    %p84 = scmp.eq.s32.totalorder %s20, 1
    %p85 = por %p83, %p84
    %p86 = scmp.ne.s32.totalorder %s77, %s78
    %p87 = scmp.eq.s32.totalorder %s20, 0
    %p88 = por %p86, %p87
    %p89 = scmp.ne.s32.totalorder %s77, %s78
    %p90 = scmp.eq.s32.totalorder %s21, 1
    %p91 = por %p89, %p90
    %p93 = scmp.ne.s32.totalorder %s78, %s92
    %p94 = scmp.eq.s32.totalorder %s21, 0
    %p95 = por %p93, %p94
    %s97 = sadd.s32 %s96, 1
    %p100 = scmp.eq.s32.totalorder %s15, 1
    %p101 = scmp.ne.s32.totalorder %s96, %s98
    %p102 = scmp.eq.s32.totalorder %s15, 0
    %p103 = por %p101, %p102
    %p104 = scmp.ne.s32.totalorder %s96, %s98
    %p105 = scmp.eq.s32.totalorder %s20, 1
    %p106 = por %p104, %p105
    %p107 = scmp.ne.s32.totalorder %s98, %s99
    %p108 = scmp.eq.s32.totalorder %s20, 0
    %p109 = por %p107, %p108
    %p110 = scmp.ne.s32.totalorder %s98, %s99
    %p111 = scmp.eq.s32.totalorder %s21, 1
    %p112 = por %p110, %p111
    %p114 = scmp.ne.s32.totalorder %s99, %s113
    %p115 = scmp.eq.s32.totalorder %s21, 0
    %p116 = por %p114, %p115
    %s118 = sadd.s32 %s117, 1
    %p121 = scmp.eq.s32.totalorder %s15, 1
    %p122 = scmp.ne.s32.totalorder %s117, %s119
    %p123 = scmp.eq.s32.totalorder %s15, 0
    %p124 = por %p122, %p123
    %p125 = scmp.ne.s32.totalorder %s117, %s119
    %p126 = scmp.eq.s32.totalorder %s20, 1
    %p127 = por %p125, %p126
    %p128 = scmp.ne.s32.totalorder %s119, %s120
    %p129 = scmp.eq.s32.totalorder %s20, 0
    %p130 = por %p128, %p129
    %p131 = scmp.ne.s32.totalorder %s119, %s120
    %p132 = scmp.eq.s32.totalorder %s21, 1
    %p133 = por %p131, %p132
    %p135 = scmp.ne.s32.totalorder %s120, %s134
    %p136 = scmp.eq.s32.totalorder %s21, 0
    %p137 = por %p135, %p136
    %s139 = sadd.s32 %s138, 1
    %p142 = scmp.eq.s32.totalorder %s15, 1
    %p143 = scmp.ne.s32.totalorder %s138, %s140
    %p144 = scmp.eq.s32.totalorder %s15, 0
    %p145 = por %p143, %p144
    %p146 = scmp.ne.s32.totalorder %s138, %s140
    %p147 = scmp.eq.s32.totalorder %s20, 1
    %p148 = por %p146, %p147
    %p149 = scmp.ne.s32.totalorder %s140, %s141
    %p150 = scmp.eq.s32.totalorder %s20, 0
    %p151 = por %p149, %p150
    %p152 = scmp.ne.s32.totalorder %s140, %s141
    %p153 = scmp.eq.s32.totalorder %s21, 1
    %p154 = por %p152, %p153
    %p156 = scmp.ne.s32.totalorder %s141, %s155
    %p157 = scmp.eq.s32.totalorder %s21, 0
    %p158 = por %p156, %p157
    %s160 = sadd.s32 %s159, 1
    %p163 = scmp.eq.s32.totalorder %s15, 1
    %p164 = scmp.ne.s32.totalorder %s159, %s161
    %p165 = scmp.eq.s32.totalorder %s15, 0
    %p166 = por %p164, %p165
    %p167 = scmp.ne.s32.totalorder %s159, %s161
    %p168 = scmp.eq.s32.totalorder %s20, 1
    %p169 = por %p167, %p168
    %p170 = scmp.ne.s32.totalorder %s161, %s162
    %p171 = scmp.eq.s32.totalorder %s20, 0
    %p172 = por %p170, %p171
    %p173 = scmp.ne.s32.totalorder %s161, %s162
    %p174 = scmp.eq.s32.totalorder %s21, 1
    %p175 = por %p173, %p174
    %p177 = scmp.ne.s32.totalorder %s162, %s176
    %p178 = scmp.eq.s32.totalorder %s21, 0
    %p179 = por %p177, %p178
    %s181 = sadd.s32 %s180, 1
    %p184 = scmp.eq.s32.totalorder %s15, 1
    %p185 = scmp.ne.s32.totalorder %s180, %s182
    %p186 = scmp.eq.s32.totalorder %s15, 0
    %p187 = por %p185, %p186
    %p188 = scmp.ne.s32.totalorder %s180, %s182
    %p189 = scmp.eq.s32.totalorder %s20, 1
    %p190 = por %p188, %p189
    %p191 = scmp.ne.s32.totalorder %s182, %s183
    %p192 = scmp.eq.s32.totalorder %s20, 0
    %p193 = por %p191, %p192
    %p194 = scmp.ne.s32.totalorder %s182, %s183
    %p195 = scmp.eq.s32.totalorder %s21, 1
    %p196 = por %p194, %p195
    %p198 = scmp.ne.s32.totalorder %s183, %s197
    %p199 = scmp.eq.s32.totalorder %s21, 0
    %p200 = por %p198, %p199
    %s202 = sadd.s32 %s201, 1
    %p205 = scmp.eq.s32.totalorder %s15, 1
    %p206 = scmp.ne.s32.totalorder %s201, %s203
    %p207 = scmp.eq.s32.totalorder %s15, 0
    %p208 = por %p206, %p207
    %p209 = scmp.ne.s32.totalorder %s201, %s203
    %p210 = scmp.eq.s32.totalorder %s20, 1
    %p211 = por %p209, %p210
    %p212 = scmp.ne.s32.totalorder %s203, %s204
    %p213 = scmp.eq.s32.totalorder %s20, 0
    %p214 = por %p212, %p213
    %p215 = scmp.ne.s32.totalorder %s203, %s204
    %p216 = scmp.eq.s32.totalorder %s21, 1
    %p217 = por %p215, %p216
    %p219 = scmp.ne.s32.totalorder %s204, %s218
    %p220 = scmp.eq.s32.totalorder %s21, 0
    %p221 = por %p219, %p220
    %s222 = ssub.s32 %s15, %s22
    %p223 = scmp.eq.s32.totalorder %s222, 0
    %s225 = sadd.s32 %s224, 1
    %s226 = scalar_select %p223, %s224, %s225
    %p229 = pneg %p223
    %p230 = scmp.eq.s32.totalorder %s15, 1
    %p231 = por %p229, %p230
    %p232 = scmp.ne.s32.totalorder %s224, %s227
    %p233 = scmp.eq.s32.totalorder %s15, 0
    %p234 = por %p232, %p233
    %p235 = scmp.ne.s32.totalorder %s224, %s227
    %p236 = scmp.eq.s32.totalorder %s20, 1
    %p237 = por %p235, %p236
    %p238 = scmp.ne.s32.totalorder %s227, %s228
    %p239 = scmp.eq.s32.totalorder %s20, 0
    %p240 = por %p238, %p239
    %p241 = scmp.ne.s32.totalorder %s227, %s228
    %p242 = scmp.eq.s32.totalorder %s21, 1
    %p243 = por %p241, %p242
    %p245 = scmp.ne.s32.totalorder %s228, %s244
    %p246 = scmp.eq.s32.totalorder %s21, 0
    %p247 = por %p245, %p246
    %p248 = scmp.le.s32.totalorder 1, %s15
    %p249 = scmp.lt.s32.totalorder %s15, 3
    %p250 = pnand %p248, %p249
    %p251 = pneg %p250
    // Predicated region
    $region9: #{tpu_custom_call.1} parent=5 // pred_check
      _
    $region10: #{tpu_custom_call.1} parent=5 // pred_check_branch
      %253 = sbr.rel (%p250) target = $region12
    $region11: #{tpu_custom_call.1} parent=5 // pred_region
      %s254 = ssub.s32 %s15, 1
      // Predicated region
      $region13: #{tpu_custom_call.1} parent=11 // pred_check
        %p255 = pneg %p88
      $region14: #{tpu_custom_call.1} parent=11 // pred_check_branch
        %257 = sbr.rel (%p255) target = $region16
      $region15: #{tpu_custom_call.1} parent=11 // pred_region
        _
      $region16: #{tpu_custom_call.1} parent=11 // pred_fallthru
        _
      // Predicated region
      $region17: #{tpu_custom_call.1} parent=11 // pred_check
        %p258 = pneg %p109
      $region18: #{tpu_custom_call.1} parent=11 // pred_check_branch
        %260 = sbr.rel (%p258) target = $region20
      $region19: #{tpu_custom_call.1} parent=11 // pred_region
        _
      $region20: #{tpu_custom_call.1} parent=11 // pred_fallthru
        _
      // Predicated region
      $region21: #{tpu_custom_call.1} parent=11 // pred_check
        %p261 = pneg %p130
      $region22: #{tpu_custom_call.1} parent=11 // pred_check_branch
        %263 = sbr.rel (%p261) target = $region24
      $region23: #{tpu_custom_call.1} parent=11 // pred_region
        _
      $region24: #{tpu_custom_call.1} parent=11 // pred_fallthru
        _
      // Predicated region
      $region25: #{tpu_custom_call.1} parent=11 // pred_check
        %p264 = pneg %p151
      $region26: #{tpu_custom_call.1} parent=11 // pred_check_branch
        %266 = sbr.rel (%p264) target = $region28
      $region27: #{tpu_custom_call.1} parent=11 // pred_region
        _
      $region28: #{tpu_custom_call.1} parent=11 // pred_fallthru
        _
      // Predicated region
      $region29: #{tpu_custom_call.1} parent=11 // pred_check
        %p267 = pneg %p172
      $region30: #{tpu_custom_call.1} parent=11 // pred_check_branch
        %269 = sbr.rel (%p267) target = $region32
      $region31: #{tpu_custom_call.1} parent=11 // pred_region
        _
      $region32: #{tpu_custom_call.1} parent=11 // pred_fallthru
        _
      // Predicated region
      $region33: #{tpu_custom_call.1} parent=11 // pred_check
        %p270 = pneg %p193
      $region34: #{tpu_custom_call.1} parent=11 // pred_check_branch
        %272 = sbr.rel (%p270) target = $region36
      $region35: #{tpu_custom_call.1} parent=11 // pred_region
        _
      $region36: #{tpu_custom_call.1} parent=11 // pred_fallthru
        _
      // Predicated region
      $region37: #{tpu_custom_call.1} parent=11 // pred_check
        %p273 = pneg %p214
      $region38: #{tpu_custom_call.1} parent=11 // pred_check_branch
        %275 = sbr.rel (%p273) target = $region40
      $region39: #{tpu_custom_call.1} parent=11 // pred_region
        _
      $region40: #{tpu_custom_call.1} parent=11 // pred_fallthru
        _
    $region12: #{tpu_custom_call.1} parent=5 // pred_fallthru
      _
    %p276 = scmp.lt.s32.totalorder %s15, 2
    // Predicated region
    $region41: #{tpu_custom_call.1} parent=5 // pred_check
      %p277 = pneg %p276
    $region42: #{tpu_custom_call.1} parent=5 // pred_check_branch
      %279 = sbr.rel (%p277) target = $region44
    $region43: #{tpu_custom_call.1} parent=5 // pred_region
      // Predicated region
      $region45: #{tpu_custom_call.1} parent=43 // pred_check
        %p280 = pneg %p35
      $region46: #{tpu_custom_call.1} parent=43 // pred_check_branch
        %282 = sbr.rel (%p280) target = $region48
      $region47: #{tpu_custom_call.1} parent=43 // pred_region
        %s283 = smul.u32 16, %s15
        %p284 = scmp.lt.s32.totalorder %s283, 31
        %s285 = scalar_select %p284, %s283, 31
        %s286 = smul.addr %s285, 8
        %s287 = scalar_lea.vmem %s0, %s286
        %s288 = smul.u32 16, %s15
      $region48: #{tpu_custom_call.1} parent=43 // pred_fallthru
        _
      // Predicated region
      $region49: #{tpu_custom_call.1} parent=43 // pred_check
        %p289 = pneg %p61
      $region50: #{tpu_custom_call.1} parent=43 // pred_check_branch
        %291 = sbr.rel (%p289) target = $region52
      $region51: #{tpu_custom_call.1} parent=43 // pred_region
        %s292 = smul.u32 16, %s15
        %p293 = scmp.lt.s32.totalorder %s292, 31
        %s294 = scalar_select %p293, %s292, 31
        %s295 = smul.addr %s294, 8
        %s296 = scalar_lea.vmem %s1, %s295
        %s297 = smul.u32 16, %s15
      $region52: #{tpu_custom_call.1} parent=43 // pred_fallthru
        _
    $region44: #{tpu_custom_call.1} parent=5 // pred_fallthru
      _
    %p298 = scmp.le.s32.totalorder 1, %s15
    %p299 = scmp.lt.s32.totalorder %s15, 3
    %p300 = pnand %p298, %p299
    %p301 = pneg %p300
    // Predicated region
    $region53: #{tpu_custom_call.1} parent=5 // pred_check
      _
    $region54: #{tpu_custom_call.1} parent=5 // pred_check_branch
      %303 = sbr.rel (%p300) target = $region56
    $region55: #{tpu_custom_call.1} parent=5 // pred_region
      %s304 = ssub.s32 %s15, 1
      %s305 = smul.u32 16, %s20
      %p306 = scmp.lt.s32.totalorder %s305, 31
      %s307 = scalar_select %p306, %s305, 31
      %s308 = smul.addr %s307, 8
      %s309 = scalar_lea.vmem %s0, %s308
      %p310 = pneg %p41
      %p311 = pneg %p38
      %s312 = smul.u32 16, %s20
      %p313 = scmp.lt.s32.totalorder %s312, 31
      %s314 = scalar_select %p313, %s312, 31
      %s315 = smul.addr %s314, 8
      %s316 = scalar_lea.vmem %s1, %s315
      %p317 = pneg %p67
      %p318 = pneg %p64
      %p319 = pneg %p88
      %p320 = pneg %p85
      %p321 = pneg %p109
      %p322 = pneg %p106
      %p323 = pneg %p130
      %p324 = pneg %p127
      %p325 = pneg %p151
      %p326 = pneg %p148
      %p327 = pneg %p172
      %p328 = pneg %p169
      %p329 = pneg %p193
      %p330 = pneg %p190
      %p331 = pneg %p214
      %p332 = pneg %p211
      %p333 = pneg %p240
      %p334 = pneg %p237
      %s335 = smul.u32 16, %s20
      %p336 = scmp.lt.s32.totalorder %s335, 31
      %s337 = scalar_select %p336, %s335, 31
      %s338 = smul.addr %s337, 8
      %s339 = scalar_lea.vmem %s9, %s338
      %s340 = smul.u32 16, %s20
      %p341 = scmp.lt.s32.totalorder %s340, 31
      %s342 = scalar_select %p341, %s340, 31
      %s343 = smul.addr %s342, 8
      %s344 = scalar_lea.vmem %s0, %s343
      %s345 = smul.u32 16, %s20
      %s346 = smul.u32 16, %s20
      %p347 = scmp.lt.s32.totalorder %s346, 31
      %s348 = scalar_select %p347, %s346, 31
      %s349 = smul.addr %s348, 8
      %s350 = scalar_lea.vmem %s1, %s349
      %s351 = smul.u32 16, %s20
      %s352 = smul.u32 16, %s20
      %p353 = scmp.lt.s32.totalorder %s352, 31
      %s354 = scalar_select %p353, %s352, 31
      %s355 = smul.addr %s354, 8
      %s356 = scalar_lea.vmem %s9, %s355
      %s357 = smul.u32 16, %s20
      %v358 = vld [vmem:[%s344] sm:$0xff]
      %v359 = vld [vmem:[%s344 + $0x8] sm:$0xff]
      %v360 = vld [vmem:[%s344 + $0x10] sm:$0xff]
      %v361 = vld [vmem:[%s344 + $0x18] sm:$0xff]
      %v362 = vld [vmem:[%s344 + $0x20] sm:$0xff]
      %v363 = vld [vmem:[%s344 + $0x28] sm:$0xff]
      %v364 = vld [vmem:[%s344 + $0x30] sm:$0xff]
      %v365 = vld [vmem:[%s344 + $0x38] sm:$0xff]
      %v366 = vld [vmem:[%s344 + $0x40] sm:$0xff]
      %v367 = vld [vmem:[%s344 + $0x48] sm:$0xff]
      %v368 = vld [vmem:[%s344 + $0x50] sm:$0xff]
      %v369 = vld [vmem:[%s344 + $0x58] sm:$0xff]
      %v370 = vld [vmem:[%s344 + $0x60] sm:$0xff]
      %v371 = vld [vmem:[%s344 + $0x68] sm:$0xff]
      %v372 = vld [vmem:[%s344 + $0x70] sm:$0xff]
      %v373 = vld [vmem:[%s344 + $0x78] sm:$0xff]
      %v374 = vld [vmem:[%s2] sm:$0xff]
      %v375 = vld [vmem:[%s2 + $0x8] sm:$0xff]
      %v376 = vld [vmem:[%s2 + $0x10] sm:$0xff]
      %v377 = vld [vmem:[%s2 + $0x18] sm:$0xf]
      %vm378 = vcmask 228352
      %v380 = vsel %vm378, %v358, 0
      %v383 = vsel %vm378, %v359, 0
      %v386 = vsel %vm378, %v360, 0
      %v389 = vsel %vm378, %v361, 0
      %v392 = vsel %vm378, %v362, 0
      %v395 = vsel %vm378, %v363, 0
      %v398 = vsel %vm378, %v364, 0
      %v401 = vsel %vm378, %v365, 0
      %v404 = vsel %vm378, %v366, 0
      %v407 = vsel %vm378, %v367, 0
      %v410 = vsel %vm378, %v368, 0
      %v413 = vsel %vm378, %v369, 0
      %v416 = vsel %vm378, %v370, 0
      %v419 = vsel %vm378, %v371, 0
      %v422 = vsel %vm378, %v372, 0
      %v425 = vsel %vm378, %v373, 0
      %vm427 = vcmask 1043456
      %v429 = vsel %vm427, %v377, 0
      %431 = vmatpush.msra.mxu0 0.0
      %432 = vmatpush.msra.mxu0 0.0
      %433 = vmatpush.msra.mxu0 0.0
      %434 = vmatpush.msra.mxu0 0.0
      %435 = vmatpush.msra.mxu0 0.0
      %436 = vmatpush.msra.mxu0 0.0
      %437 = vmatpush.msra.mxu0 0.0
      %438 = vmatpush.msra.mxu0 0.0
      %439 = vmatpush.msra.mxu0 0.0
      %440 = vmatpush.msra.mxu0 0.0
      %441 = vmatpush.msra.mxu0 0.0
      %442 = vmatpush.msra.mxu0 0.0
      %443 = vmatpush.msra.mxu0 %v429
      %444 = vmatpush.msra.mxu0 %v376
      %445 = vmatpush.msra.mxu0 %v375
      %446 = vmatpush.msra.mxu0 %v374
      %447 = vmatmul.f32.gmra.mxu0 %v380
      %v448 = vpop.f32.mrf.mxu0
      %v449 = vadd.f32 0.0, %v448
      %450 = vmatmul.f32.gmra.mxu0 %v383
      %v451 = vpop.f32.mrf.mxu0
      %v452 = vadd.f32 0.0, %v451
      %453 = vmatmul.f32.gmra.mxu0 %v386
      %v454 = vpop.f32.mrf.mxu0
      %v455 = vadd.f32 0.0, %v454
      %456 = vmatmul.f32.gmra.mxu0 %v389
      %v457 = vpop.f32.mrf.mxu0
      %v458 = vadd.f32 0.0, %v457
      %459 = vmatmul.f32.gmra.mxu0 %v392
      %v460 = vpop.f32.mrf.mxu0
      %v461 = vadd.f32 0.0, %v460
      %462 = vmatmul.f32.gmra.mxu0 %v395
      %v463 = vpop.f32.mrf.mxu0
      %v464 = vadd.f32 0.0, %v463
      %465 = vmatmul.f32.gmra.mxu0 %v398
      %v466 = vpop.f32.mrf.mxu0
      %v467 = vadd.f32 0.0, %v466
      %468 = vmatmul.f32.gmra.mxu0 %v401
      %v469 = vpop.f32.mrf.mxu0
      %v470 = vadd.f32 0.0, %v469
      %471 = vmatmul.f32.gmra.mxu0 %v404
      %v472 = vpop.f32.mrf.mxu0
      %v473 = vadd.f32 0.0, %v472
      %474 = vmatmul.f32.gmra.mxu0 %v407
      %v475 = vpop.f32.mrf.mxu0
      %v476 = vadd.f32 0.0, %v475
      %477 = vmatmul.f32.gmra.mxu0 %v410
      %v478 = vpop.f32.mrf.mxu0
      %v479 = vadd.f32 0.0, %v478
      %480 = vmatmul.f32.gmra.mxu0 %v413
      %v481 = vpop.f32.mrf.mxu0
      %v482 = vadd.f32 0.0, %v481
      %483 = vmatmul.f32.gmra.mxu0 %v416
      %v484 = vpop.f32.mrf.mxu0
      %v485 = vadd.f32 0.0, %v484
      %486 = vmatmul.f32.gmra.mxu0 %v419
      %v487 = vpop.f32.mrf.mxu0
      %v488 = vadd.f32 0.0, %v487
      %489 = vmatmul.f32.gmra.mxu0 %v422
      %v490 = vpop.f32.mrf.mxu0
      %v491 = vadd.f32 0.0, %v490
      %492 = vmatmul.f32.gmra.mxu0 %v425
      %v493 = vpop.f32.mrf.mxu0
      %v494 = vadd.f32 0.0, %v493
      %495 = vdwg.mxu0
      %vm496 = vcmask 261120
      %v497 = vsel %vm496, %v449, 0.0
      %498 = vadd.xlane.f32.xlu0 %v497
      %v499 = vpop.xlane.xlu0 %498
      %v500 = vsel %vm496, %v452, 0.0
      %501 = vadd.xlane.f32.xlu0 %v500
      %v502 = vpop.xlane.xlu0 %501
      %v503 = vsel %vm496, %v455, 0.0
      %504 = vadd.xlane.f32.xlu0 %v503
      %v505 = vpop.xlane.xlu0 %504
      %v506 = vsel %vm496, %v458, 0.0
      %507 = vadd.xlane.f32.xlu0 %v506
      %v508 = vpop.xlane.xlu0 %507
      %v509 = vsel %vm496, %v461, 0.0
      %510 = vadd.xlane.f32.xlu0 %v509
      %v511 = vpop.xlane.xlu0 %510
      %v512 = vsel %vm496, %v464, 0.0
      %513 = vadd.xlane.f32.xlu0 %v512
      %v514 = vpop.xlane.xlu0 %513
      %v515 = vsel %vm496, %v467, 0.0
      %516 = vadd.xlane.f32.xlu0 %v515
      %v517 = vpop.xlane.xlu0 %516
      %v518 = vsel %vm496, %v470, 0.0
      %519 = vadd.xlane.f32.xlu0 %v518
      %v520 = vpop.xlane.xlu0 %519
      %v521 = vsel %vm496, %v473, 0.0
      %522 = vadd.xlane.f32.xlu0 %v521
      %v523 = vpop.xlane.xlu0 %522
      %v524 = vsel %vm496, %v476, 0.0
      %525 = vadd.xlane.f32.xlu0 %v524
      %v526 = vpop.xlane.xlu0 %525
      %v527 = vsel %vm496, %v479, 0.0
      %528 = vadd.xlane.f32.xlu0 %v527
      %v529 = vpop.xlane.xlu0 %528
      %v530 = vsel %vm496, %v482, 0.0
      %531 = vadd.xlane.f32.xlu0 %v530
      %v532 = vpop.xlane.xlu0 %531
      %v533 = vsel %vm496, %v485, 0.0
      %534 = vadd.xlane.f32.xlu0 %v533
      %v535 = vpop.xlane.xlu0 %534
      %v536 = vsel %vm496, %v488, 0.0
      %537 = vadd.xlane.f32.xlu0 %v536
      %v538 = vpop.xlane.xlu0 %537
      %v539 = vsel %vm496, %v491, 0.0
      %540 = vadd.xlane.f32.xlu0 %v539
      %v541 = vpop.xlane.xlu0 %540
      %v542 = vsel %vm496, %v494, 0.0
      %543 = vadd.xlane.f32.xlu0 %v542
      %v544 = vpop.xlane.xlu0 %543
      %v545 = vrcp.pop 32.0
      %v546 = vmul.f32 32.0, %v545
      %v547 = vsub.f32 1.0, %v546
      %v548 = vmul.f32 %v545, %v547
      %v549 = vadd.f32 %v545, %v548
      %vm550 = vweird.f32 %v545
      %v551 = vsel %vm550, %v545, %v549
      %v552 = vmul.f32 %v499, %v551
      %v553 = vmul.f32 %v502, %v551
      %v554 = vmul.f32 %v505, %v551
      %v555 = vmul.f32 %v508, %v551
      %v556 = vmul.f32 %v511, %v551
      %v557 = vmul.f32 %v514, %v551
      %v558 = vmul.f32 %v517, %v551
      %v559 = vmul.f32 %v520, %v551
      %v560 = vmul.f32 %v523, %v551
      %v561 = vmul.f32 %v526, %v551
      %v562 = vmul.f32 %v529, %v551
      %v563 = vmul.f32 %v532, %v551
      %v564 = vmul.f32 %v535, %v551
      %v565 = vmul.f32 %v538, %v551
      %v566 = vmul.f32 %v541, %v551
      %v567 = vmul.f32 %v544, %v551
      %v568 = vsub.f32 %v449, %v552
      %v569 = vsub.f32 %v452, %v553
      %v570 = vsub.f32 %v455, %v554
      %v571 = vsub.f32 %v458, %v555
      %v572 = vsub.f32 %v461, %v556
      %v573 = vsub.f32 %v464, %v557
      %v574 = vsub.f32 %v467, %v558
      %v575 = vsub.f32 %v470, %v559
      %v576 = vsub.f32 %v473, %v560
      %v577 = vsub.f32 %v476, %v561
      %v578 = vsub.f32 %v479, %v562
      %v579 = vsub.f32 %v482, %v563
      %v580 = vsub.f32 %v485, %v564
      %v581 = vsub.f32 %v488, %v565
      %v582 = vsub.f32 %v491, %v566
      %v583 = vsub.f32 %v494, %v567
      %v584 = vmul.f32 %v568, %v568
      %v585 = vmul.f32 %v569, %v569
      %v586 = vmul.f32 %v570, %v570
      %v587 = vmul.f32 %v571, %v571
      %v588 = vmul.f32 %v572, %v572
      %v589 = vmul.f32 %v573, %v573
      %v590 = vmul.f32 %v574, %v574
      %v591 = vmul.f32 %v575, %v575
      %v592 = vmul.f32 %v576, %v576
      %v593 = vmul.f32 %v577, %v577
      %v594 = vmul.f32 %v578, %v578
      %v595 = vmul.f32 %v579, %v579
      %v596 = vmul.f32 %v580, %v580
      %v597 = vmul.f32 %v581, %v581
      %v598 = vmul.f32 %v582, %v582
      %v599 = vmul.f32 %v583, %v583
      %v600 = vsel %vm496, %v584, 0.0
      %601 = vadd.xlane.f32.xlu0 %v600
      %v602 = vpop.xlane.xlu0 %601
      %v603 = vsel %vm496, %v585, 0.0
      %604 = vadd.xlane.f32.xlu0 %v603
      %v605 = vpop.xlane.xlu0 %604
      %v606 = vsel %vm496, %v586, 0.0
      %607 = vadd.xlane.f32.xlu0 %v606
      %v608 = vpop.xlane.xlu0 %607
      %v609 = vsel %vm496, %v587, 0.0
      %610 = vadd.xlane.f32.xlu0 %v609
      %v611 = vpop.xlane.xlu0 %610
      %v612 = vsel %vm496, %v588, 0.0
      %613 = vadd.xlane.f32.xlu0 %v612
      %v614 = vpop.xlane.xlu0 %613
      %v615 = vsel %vm496, %v589, 0.0
      %616 = vadd.xlane.f32.xlu0 %v615
      %v617 = vpop.xlane.xlu0 %616
      %v618 = vsel %vm496, %v590, 0.0
      %619 = vadd.xlane.f32.xlu0 %v618
      %v620 = vpop.xlane.xlu0 %619
      %v621 = vsel %vm496, %v591, 0.0
      %622 = vadd.xlane.f32.xlu0 %v621
      %v623 = vpop.xlane.xlu0 %622
      %v624 = vsel %vm496, %v592, 0.0
      %625 = vadd.xlane.f32.xlu0 %v624
      %v626 = vpop.xlane.xlu0 %625
      %v627 = vsel %vm496, %v593, 0.0
      %628 = vadd.xlane.f32.xlu0 %v627
      %v629 = vpop.xlane.xlu0 %628
      %v630 = vsel %vm496, %v594, 0.0
      %631 = vadd.xlane.f32.xlu0 %v630
      %v632 = vpop.xlane.xlu0 %631
      %v633 = vsel %vm496, %v595, 0.0
      %634 = vadd.xlane.f32.xlu0 %v633
      %v635 = vpop.xlane.xlu0 %634
      %v636 = vsel %vm496, %v596, 0.0
      %637 = vadd.xlane.f32.xlu0 %v636
      %v638 = vpop.xlane.xlu0 %637
      %v639 = vsel %vm496, %v597, 0.0
      %640 = vadd.xlane.f32.xlu0 %v639
      %v641 = vpop.xlane.xlu0 %640
      %v642 = vsel %vm496, %v598, 0.0
      %643 = vadd.xlane.f32.xlu0 %v642
      %v644 = vpop.xlane.xlu0 %643
      %v645 = vsel %vm496, %v599, 0.0
      %646 = vadd.xlane.f32.xlu0 %v645
      %v647 = vpop.xlane.xlu0 %646
      %v648 = vmul.f32 %v602, %v551
      %v649 = vmul.f32 %v605, %v551
      %v650 = vmul.f32 %v608, %v551
      %v651 = vmul.f32 %v611, %v551
      %v652 = vmul.f32 %v614, %v551
      %v653 = vmul.f32 %v617, %v551
      %v654 = vmul.f32 %v620, %v551
      %v655 = vmul.f32 %v623, %v551
      %v656 = vmul.f32 %v626, %v551
      %v657 = vmul.f32 %v629, %v551
      %v658 = vmul.f32 %v632, %v551
      %v659 = vmul.f32 %v635, %v551
      %v660 = vmul.f32 %v638, %v551
      %v661 = vmul.f32 %v641, %v551
      %v662 = vmul.f32 %v644, %v551
      %v663 = vmul.f32 %v647, %v551
      %v664 = vadd.f32 %v648, 1e-05
      %v665 = vadd.f32 %v649, 1e-05
      %v666 = vadd.f32 %v650, 1e-05
      %v667 = vadd.f32 %v651, 1e-05
      %v668 = vadd.f32 %v652, 1e-05
      %v669 = vadd.f32 %v653, 1e-05
      %v670 = vadd.f32 %v654, 1e-05
      %v671 = vadd.f32 %v655, 1e-05
      %v672 = vadd.f32 %v656, 1e-05
      %v673 = vadd.f32 %v657, 1e-05
      %v674 = vadd.f32 %v658, 1e-05
      %v675 = vadd.f32 %v659, 1e-05
      %v676 = vadd.f32 %v660, 1e-05
      %v677 = vadd.f32 %v661, 1e-05
      %v678 = vadd.f32 %v662, 1e-05
      %v679 = vadd.f32 %v663, 1e-05
      %v680 = vrsqrt.pop %v664
      %v681 = vmul.f32 %v680, %v664
      %v682 = vmul.f32 %v681, %v680
      %v683 = vmul.f32 0.5, %v682
      %v684 = vsub.f32 1.5, %v683
      %v685 = vmul.f32 %v680, %v684
      %vm686 = vweird.f32 %v664
      %vm687 = vweird.f32 %v680
      %vm688 = vmor %vm686, %vm687
      %v689 = vsel %vm688, %v680, %v685
      %v690 = vrsqrt.pop %v665
      %v691 = vmul.f32 %v690, %v665
      %v692 = vmul.f32 %v691, %v690
      %v693 = vmul.f32 0.5, %v692
      %v694 = vsub.f32 1.5, %v693
      %v695 = vmul.f32 %v690, %v694
      %vm696 = vweird.f32 %v665
      %vm697 = vweird.f32 %v690
      %vm698 = vmor %vm696, %vm697
      %v699 = vsel %vm698, %v690, %v695
      %v700 = vrsqrt.pop %v666
      %v701 = vmul.f32 %v700, %v666
      %v702 = vmul.f32 %v701, %v700
      %v703 = vmul.f32 0.5, %v702
      %v704 = vsub.f32 1.5, %v703
      %v705 = vmul.f32 %v700, %v704
      %vm706 = vweird.f32 %v666
      %vm707 = vweird.f32 %v700
      %vm708 = vmor %vm706, %vm707
      %v709 = vsel %vm708, %v700, %v705
      %v710 = vrsqrt.pop %v667
      %v711 = vmul.f32 %v710, %v667
      %v712 = vmul.f32 %v711, %v710
      %v713 = vmul.f32 0.5, %v712
      %v714 = vsub.f32 1.5, %v713
      %v715 = vmul.f32 %v710, %v714
      %vm716 = vweird.f32 %v667
      %vm717 = vweird.f32 %v710
      %vm718 = vmor %vm716, %vm717
      %v719 = vsel %vm718, %v710, %v715
      %v720 = vrsqrt.pop %v668
      %v721 = vmul.f32 %v720, %v668
      %v722 = vmul.f32 %v721, %v720
      %v723 = vmul.f32 0.5, %v722
      %v724 = vsub.f32 1.5, %v723
      %v725 = vmul.f32 %v720, %v724
      %vm726 = vweird.f32 %v668
      %vm727 = vweird.f32 %v720
      %vm728 = vmor %vm726, %vm727
      %v729 = vsel %vm728, %v720, %v725
      %v730 = vrsqrt.pop %v669
      %v731 = vmul.f32 %v730, %v669
      %v732 = vmul.f32 %v731, %v730
      %v733 = vmul.f32 0.5, %v732
      %v734 = vsub.f32 1.5, %v733
      %v735 = vmul.f32 %v730, %v734
      %vm736 = vweird.f32 %v669
      %vm737 = vweird.f32 %v730
      %vm738 = vmor %vm736, %vm737
      %v739 = vsel %vm738, %v730, %v735
      %v740 = vrsqrt.pop %v670
      %v741 = vmul.f32 %v740, %v670
      %v742 = vmul.f32 %v741, %v740
      %v743 = vmul.f32 0.5, %v742
      %v744 = vsub.f32 1.5, %v743
      %v745 = vmul.f32 %v740, %v744
      %vm746 = vweird.f32 %v670
      %vm747 = vweird.f32 %v740
      %vm748 = vmor %vm746, %vm747
      %v749 = vsel %vm748, %v740, %v745
      %v750 = vrsqrt.pop %v671
      %v751 = vmul.f32 %v750, %v671
      %v752 = vmul.f32 %v751, %v750
      %v753 = vmul.f32 0.5, %v752
      %v754 = vsub.f32 1.5, %v753
      %v755 = vmul.f32 %v750, %v754
      %vm756 = vweird.f32 %v671
      %vm757 = vweird.f32 %v750
      %vm758 = vmor %vm756, %vm757
      %v759 = vsel %vm758, %v750, %v755
      %v760 = vrsqrt.pop %v672
      %v761 = vmul.f32 %v760, %v672
      %v762 = vmul.f32 %v761, %v760
      %v763 = vmul.f32 0.5, %v762
      %v764 = vsub.f32 1.5, %v763
      %v765 = vmul.f32 %v760, %v764
      %vm766 = vweird.f32 %v672
      %vm767 = vweird.f32 %v760
      %vm768 = vmor %vm766, %vm767
      %v769 = vsel %vm768, %v760, %v765
      %v770 = vrsqrt.pop %v673
      %v771 = vmul.f32 %v770, %v673
      %v772 = vmul.f32 %v771, %v770
      %v773 = vmul.f32 0.5, %v772
      %v774 = vsub.f32 1.5, %v773
      %v775 = vmul.f32 %v770, %v774
      %vm776 = vweird.f32 %v673
      %vm777 = vweird.f32 %v770
      %vm778 = vmor %vm776, %vm777
      %v779 = vsel %vm778, %v770, %v775
      %v780 = vrsqrt.pop %v674
      %v781 = vmul.f32 %v780, %v674
      %v782 = vmul.f32 %v781, %v780
      %v783 = vmul.f32 0.5, %v782
      %v784 = vsub.f32 1.5, %v783
      %v785 = vmul.f32 %v780, %v784
      %vm786 = vweird.f32 %v674
      %vm787 = vweird.f32 %v780
      %vm788 = vmor %vm786, %vm787
      %v789 = vsel %vm788, %v780, %v785
      %v790 = vrsqrt.pop %v675
      %v791 = vmul.f32 %v790, %v675
      %v792 = vmul.f32 %v791, %v790
      %v793 = vmul.f32 0.5, %v792
      %v794 = vsub.f32 1.5, %v793
      %v795 = vmul.f32 %v790, %v794
      %vm796 = vweird.f32 %v675
      %vm797 = vweird.f32 %v790
      %vm798 = vmor %vm796, %vm797
      %v799 = vsel %vm798, %v790, %v795
      %v800 = vrsqrt.pop %v676
      %v801 = vmul.f32 %v800, %v676
      %v802 = vmul.f32 %v801, %v800
      %v803 = vmul.f32 0.5, %v802
      %v804 = vsub.f32 1.5, %v803
      %v805 = vmul.f32 %v800, %v804
      %vm806 = vweird.f32 %v676
      %vm807 = vweird.f32 %v800
      %vm808 = vmor %vm806, %vm807
      %v809 = vsel %vm808, %v800, %v805
      %v810 = vrsqrt.pop %v677
      %v811 = vmul.f32 %v810, %v677
      %v812 = vmul.f32 %v811, %v810
      %v813 = vmul.f32 0.5, %v812
      %v814 = vsub.f32 1.5, %v813
      %v815 = vmul.f32 %v810, %v814
      %vm816 = vweird.f32 %v677
      %vm817 = vweird.f32 %v810
      %vm818 = vmor %vm816, %vm817
      %v819 = vsel %vm818, %v810, %v815
      %v820 = vrsqrt.pop %v678
      %v821 = vmul.f32 %v820, %v678
      %v822 = vmul.f32 %v821, %v820
      %v823 = vmul.f32 0.5, %v822
      %v824 = vsub.f32 1.5, %v823
      %v825 = vmul.f32 %v820, %v824
      %vm826 = vweird.f32 %v678
      %vm827 = vweird.f32 %v820
      %vm828 = vmor %vm826, %vm827
      %v829 = vsel %vm828, %v820, %v825
      %v830 = vrsqrt.pop %v679
      %v831 = vmul.f32 %v830, %v679
      %v832 = vmul.f32 %v831, %v830
      %v833 = vmul.f32 0.5, %v832
      %v834 = vsub.f32 1.5, %v833
      %v835 = vmul.f32 %v830, %v834
      %vm836 = vweird.f32 %v679
      %vm837 = vweird.f32 %v830
      %vm838 = vmor %vm836, %vm837
      %v839 = vsel %vm838, %v830, %v835
      %v840 = vmul.f32 %v568, %v689
      %v841 = vmul.f32 %v569, %v699
      %v842 = vmul.f32 %v570, %v709
      %v843 = vmul.f32 %v571, %v719
      %v844 = vmul.f32 %v572, %v729
      %v845 = vmul.f32 %v573, %v739
      %v846 = vmul.f32 %v574, %v749
      %v847 = vmul.f32 %v575, %v759
      %v848 = vmul.f32 %v576, %v769
      %v849 = vmul.f32 %v577, %v779
      %v850 = vmul.f32 %v578, %v789
      %v851 = vmul.f32 %v579, %v799
      %v852 = vmul.f32 %v580, %v809
      %v853 = vmul.f32 %v581, %v819
      %v854 = vmul.f32 %v582, %v829
      %v855 = vmul.f32 %v583, %v839
      %v856 = vld [vmem:[%s3] sm:$0x1]
      %v857 = vperm.slane %v856, 0
      %v858 = vmul.f32 %v840, %v857
      %v859 = vmul.f32 %v841, %v857
      %v860 = vmul.f32 %v842, %v857
      %v861 = vmul.f32 %v843, %v857
      %v862 = vmul.f32 %v844, %v857
      %v863 = vmul.f32 %v845, %v857
      %v864 = vmul.f32 %v846, %v857
      %v865 = vmul.f32 %v847, %v857
      %v866 = vmul.f32 %v848, %v857
      %v867 = vmul.f32 %v849, %v857
      %v868 = vmul.f32 %v850, %v857
      %v869 = vmul.f32 %v851, %v857
      %v870 = vmul.f32 %v852, %v857
      %v871 = vmul.f32 %v853, %v857
      %v872 = vmul.f32 %v854, %v857
      %v873 = vmul.f32 %v855, %v857
      %v874 = vld [vmem:[%s3 + $0x1] sm:$0x1]
      %v875 = vperm.slane %v874, 0
      %v876 = vadd.f32 %v858, %v875
      %v877 = vadd.f32 %v859, %v875
      %v878 = vadd.f32 %v860, %v875
      %v879 = vadd.f32 %v861, %v875
      %v880 = vadd.f32 %v862, %v875
      %v881 = vadd.f32 %v863, %v875
      %v882 = vadd.f32 %v864, %v875
      %v883 = vadd.f32 %v865, %v875
      %v884 = vadd.f32 %v866, %v875
      %v885 = vadd.f32 %v867, %v875
      %v886 = vadd.f32 %v868, %v875
      %v887 = vadd.f32 %v869, %v875
      %v888 = vadd.f32 %v870, %v875
      %v889 = vadd.f32 %v871, %v875
      %v890 = vadd.f32 %v872, %v875
      %v891 = vadd.f32 %v873, %v875
      %v892 = vmax.f32 %v876, 0.0
      %v893 = vmax.f32 %v877, 0.0
      %v894 = vmax.f32 %v878, 0.0
      %v895 = vmax.f32 %v879, 0.0
      %v896 = vmax.f32 %v880, 0.0
      %v897 = vmax.f32 %v881, 0.0
      %v898 = vmax.f32 %v882, 0.0
      %v899 = vmax.f32 %v883, 0.0
      %v900 = vmax.f32 %v884, 0.0
      %v901 = vmax.f32 %v885, 0.0
      %v902 = vmax.f32 %v886, 0.0
      %v903 = vmax.f32 %v887, 0.0
      %v904 = vmax.f32 %v888, 0.0
      %v905 = vmax.f32 %v889, 0.0
      %v906 = vmax.f32 %v890, 0.0
      %v907 = vmax.f32 %v891, 0.0
      %v908 = vld [vmem:[%s350] sm:$0xff]
      %v909 = vld [vmem:[%s350 + $0x8] sm:$0xff]
      %v910 = vld [vmem:[%s350 + $0x10] sm:$0xff]
      %v911 = vld [vmem:[%s350 + $0x18] sm:$0xff]
      %v912 = vld [vmem:[%s350 + $0x20] sm:$0xff]
      %v913 = vld [vmem:[%s350 + $0x28] sm:$0xff]
      %v914 = vld [vmem:[%s350 + $0x30] sm:$0xff]
      %v915 = vld [vmem:[%s350 + $0x38] sm:$0xff]
      %v916 = vld [vmem:[%s350 + $0x40] sm:$0xff]
      %v917 = vld [vmem:[%s350 + $0x48] sm:$0xff]
      %v918 = vld [vmem:[%s350 + $0x50] sm:$0xff]
      %v919 = vld [vmem:[%s350 + $0x58] sm:$0xff]
      %v920 = vld [vmem:[%s350 + $0x60] sm:$0xff]
      %v921 = vld [vmem:[%s350 + $0x68] sm:$0xff]
      %v922 = vld [vmem:[%s350 + $0x70] sm:$0xff]
      %v923 = vld [vmem:[%s350 + $0x78] sm:$0xff]
      %v924 = vld [vmem:[%s4] sm:$0xff]
      %v925 = vld [vmem:[%s4 + $0x8] sm:$0xff]
      %v926 = vld [vmem:[%s4 + $0x10] sm:$0xff]
      %v927 = vld [vmem:[%s4 + $0x18] sm:$0xff]
      %v929 = vsel %vm496, %v892, 0
      %v932 = vsel %vm496, %v893, 0
      %v935 = vsel %vm496, %v894, 0
      %v938 = vsel %vm496, %v895, 0
      %v941 = vsel %vm496, %v896, 0
      %v944 = vsel %vm496, %v897, 0
      %v947 = vsel %vm496, %v898, 0
      %v950 = vsel %vm496, %v899, 0
      %v953 = vsel %vm496, %v900, 0
      %v956 = vsel %vm496, %v901, 0
      %v959 = vsel %vm496, %v902, 0
      %v962 = vsel %vm496, %v903, 0
      %v965 = vsel %vm496, %v904, 0
      %v968 = vsel %vm496, %v905, 0
      %v971 = vsel %vm496, %v906, 0
      %v974 = vsel %vm496, %v907, 0
      %976 = vmatpush.msra.mxu0 0.0
      %977 = vmatpush.msra.mxu0 0.0
      %978 = vmatpush.msra.mxu0 0.0
      %979 = vmatpush.msra.mxu0 0.0
      %980 = vmatpush.msra.mxu0 0.0
      %981 = vmatpush.msra.mxu0 0.0
      %982 = vmatpush.msra.mxu0 0.0
      %983 = vmatpush.msra.mxu0 0.0
      %984 = vmatpush.msra.mxu0 0.0
      %985 = vmatpush.msra.mxu0 0.0
      %986 = vmatpush.msra.mxu0 0.0
      %987 = vmatpush.msra.mxu0 0.0
      %988 = vmatpush.msra.mxu0 %v927
      %989 = vmatpush.msra.mxu0 %v926
      %990 = vmatpush.msra.mxu0 %v925
      %991 = vmatpush.msra.mxu0 %v924
      %992 = vmatmul.f32.gmra.mxu0 %v929
      %v993 = vpop.f32.mrf.mxu0
      %v994 = vadd.f32 0.0, %v993
      %995 = vmatmul.f32.gmra.mxu0 %v932
      %v996 = vpop.f32.mrf.mxu0
      %v997 = vadd.f32 0.0, %v996
      %998 = vmatmul.f32.gmra.mxu0 %v935
      %v999 = vpop.f32.mrf.mxu0
      %v1000 = vadd.f32 0.0, %v999
      %1001 = vmatmul.f32.gmra.mxu0 %v938
      %v1002 = vpop.f32.mrf.mxu0
      %v1003 = vadd.f32 0.0, %v1002
      %1004 = vmatmul.f32.gmra.mxu0 %v941
      %v1005 = vpop.f32.mrf.mxu0
      %v1006 = vadd.f32 0.0, %v1005
      %1007 = vmatmul.f32.gmra.mxu0 %v944
      %v1008 = vpop.f32.mrf.mxu0
      %v1009 = vadd.f32 0.0, %v1008
      %1010 = vmatmul.f32.gmra.mxu0 %v947
      %v1011 = vpop.f32.mrf.mxu0
      %v1012 = vadd.f32 0.0, %v1011
      %1013 = vmatmul.f32.gmra.mxu0 %v950
      %v1014 = vpop.f32.mrf.mxu0
      %v1015 = vadd.f32 0.0, %v1014
      %1016 = vmatmul.f32.gmra.mxu0 %v953
      %v1017 = vpop.f32.mrf.mxu0
      %v1018 = vadd.f32 0.0, %v1017
      %1019 = vmatmul.f32.gmra.mxu0 %v956
      %v1020 = vpop.f32.mrf.mxu0
      %v1021 = vadd.f32 0.0, %v1020
      %1022 = vmatmul.f32.gmra.mxu0 %v959
      %v1023 = vpop.f32.mrf.mxu0
      %v1024 = vadd.f32 0.0, %v1023
      %1025 = vmatmul.f32.gmra.mxu0 %v962
      %v1026 = vpop.f32.mrf.mxu0
      %v1027 = vadd.f32 0.0, %v1026
      %1028 = vmatmul.f32.gmra.mxu0 %v965
      %v1029 = vpop.f32.mrf.mxu0
      %v1030 = vadd.f32 0.0, %v1029
      %1031 = vmatmul.f32.gmra.mxu0 %v968
      %v1032 = vpop.f32.mrf.mxu0
      %v1033 = vadd.f32 0.0, %v1032
      %1034 = vmatmul.f32.gmra.mxu0 %v971
      %v1035 = vpop.f32.mrf.mxu0
      %v1036 = vadd.f32 0.0, %v1035
      %1037 = vmatmul.f32.gmra.mxu0 %v974
      %v1038 = vpop.f32.mrf.mxu0
      %v1039 = vadd.f32 0.0, %v1038
      %1040 = vdwg.mxu0
      %v1041 = vld [vmem:[%s5] sm:$0xff]
      %v1042 = vld [vmem:[%s5 + $0x8] sm:$0xff]
      %v1043 = vld [vmem:[%s5 + $0x10] sm:$0xff]
      %v1044 = vld [vmem:[%s5 + $0x18] sm:$0xff]
      %v1046 = vsel %vm496, %v908, 0
      %v1049 = vsel %vm496, %v909, 0
      %v1052 = vsel %vm496, %v910, 0
      %v1055 = vsel %vm496, %v911, 0
      %v1058 = vsel %vm496, %v912, 0
      %v1061 = vsel %vm496, %v913, 0
      %v1064 = vsel %vm496, %v914, 0
      %v1067 = vsel %vm496, %v915, 0
      %v1070 = vsel %vm496, %v916, 0
      %v1073 = vsel %vm496, %v917, 0
      %v1076 = vsel %vm496, %v918, 0
      %v1079 = vsel %vm496, %v919, 0
      %v1082 = vsel %vm496, %v920, 0
      %v1085 = vsel %vm496, %v921, 0
      %v1088 = vsel %vm496, %v922, 0
      %v1091 = vsel %vm496, %v923, 0
      %1093 = vmatpush.msra.mxu0 0.0
      %1094 = vmatpush.msra.mxu0 0.0
      %1095 = vmatpush.msra.mxu0 0.0
      %1096 = vmatpush.msra.mxu0 0.0
      %1097 = vmatpush.msra.mxu0 0.0
      %1098 = vmatpush.msra.mxu0 0.0
      %1099 = vmatpush.msra.mxu0 0.0
      %1100 = vmatpush.msra.mxu0 0.0
      %1101 = vmatpush.msra.mxu0 0.0
      %1102 = vmatpush.msra.mxu0 0.0
      %1103 = vmatpush.msra.mxu0 0.0
      %1104 = vmatpush.msra.mxu0 0.0
      %1105 = vmatpush.msra.mxu0 %v1044
      %1106 = vmatpush.msra.mxu0 %v1043
      %1107 = vmatpush.msra.mxu0 %v1042
      %1108 = vmatpush.msra.mxu0 %v1041
      %1109 = vmatmul.f32.gmra.mxu0 %v1046
      %v1110 = vpop.f32.mrf.mxu0
      %v1111 = vadd.f32 0.0, %v1110
      %1112 = vmatmul.f32.gmra.mxu0 %v1049
      %v1113 = vpop.f32.mrf.mxu0
      %v1114 = vadd.f32 0.0, %v1113
      %1115 = vmatmul.f32.gmra.mxu0 %v1052
      %v1116 = vpop.f32.mrf.mxu0
      %v1117 = vadd.f32 0.0, %v1116
      %1118 = vmatmul.f32.gmra.mxu0 %v1055
      %v1119 = vpop.f32.mrf.mxu0
      %v1120 = vadd.f32 0.0, %v1119
      %1121 = vmatmul.f32.gmra.mxu0 %v1058
      %v1122 = vpop.f32.mrf.mxu0
      %v1123 = vadd.f32 0.0, %v1122
      %1124 = vmatmul.f32.gmra.mxu0 %v1061
      %v1125 = vpop.f32.mrf.mxu0
      %v1126 = vadd.f32 0.0, %v1125
      %1127 = vmatmul.f32.gmra.mxu0 %v1064
      %v1128 = vpop.f32.mrf.mxu0
      %v1129 = vadd.f32 0.0, %v1128
      %1130 = vmatmul.f32.gmra.mxu0 %v1067
      %v1131 = vpop.f32.mrf.mxu0
      %v1132 = vadd.f32 0.0, %v1131
      %1133 = vmatmul.f32.gmra.mxu0 %v1070
      %v1134 = vpop.f32.mrf.mxu0
      %v1135 = vadd.f32 0.0, %v1134
      %1136 = vmatmul.f32.gmra.mxu0 %v1073
      %v1137 = vpop.f32.mrf.mxu0
      %v1138 = vadd.f32 0.0, %v1137
      %1139 = vmatmul.f32.gmra.mxu0 %v1076
      %v1140 = vpop.f32.mrf.mxu0
      %v1141 = vadd.f32 0.0, %v1140
      %1142 = vmatmul.f32.gmra.mxu0 %v1079
      %v1143 = vpop.f32.mrf.mxu0
      %v1144 = vadd.f32 0.0, %v1143
      %1145 = vmatmul.f32.gmra.mxu0 %v1082
      %v1146 = vpop.f32.mrf.mxu0
      %v1147 = vadd.f32 0.0, %v1146
      %1148 = vmatmul.f32.gmra.mxu0 %v1085
      %v1149 = vpop.f32.mrf.mxu0
      %v1150 = vadd.f32 0.0, %v1149
      %1151 = vmatmul.f32.gmra.mxu0 %v1088
      %v1152 = vpop.f32.mrf.mxu0
      %v1153 = vadd.f32 0.0, %v1152
      %1154 = vmatmul.f32.gmra.mxu0 %v1091
      %v1155 = vpop.f32.mrf.mxu0
      %v1156 = vadd.f32 0.0, %v1155
      %1157 = vdwg.mxu0
      %v1158 = vld [vmem:[%s6] sm:$0x1]
      %v1159 = vadd.f32 %v994, %v1111
      %v1160 = vadd.f32 %v997, %v1114
      %v1161 = vadd.f32 %v1000, %v1117
      %v1162 = vadd.f32 %v1003, %v1120
      %v1163 = vadd.f32 %v1006, %v1123
      %v1164 = vadd.f32 %v1009, %v1126
      %v1165 = vadd.f32 %v1012, %v1129
      %v1166 = vadd.f32 %v1015, %v1132
      %v1167 = vadd.f32 %v1018, %v1135
      %v1168 = vadd.f32 %v1021, %v1138
      %v1169 = vadd.f32 %v1024, %v1141
      %v1170 = vadd.f32 %v1027, %v1144
      %v1171 = vadd.f32 %v1030, %v1147
      %v1172 = vadd.f32 %v1033, %v1150
      %v1173 = vadd.f32 %v1036, %v1153
      %v1174 = vadd.f32 %v1039, %v1156
      %v1176 = vperm.slane %v1158, 0
      %v1178 = vadd.f32 %v1159, %v1176
      %v1179 = vadd.f32 %v1160, %v1176
      %v1180 = vadd.f32 %v1161, %v1176
      %v1181 = vadd.f32 %v1162, %v1176
      %v1182 = vadd.f32 %v1163, %v1176
      %v1183 = vadd.f32 %v1164, %v1176
      %v1184 = vadd.f32 %v1165, %v1176
      %v1185 = vadd.f32 %v1166, %v1176
      %v1186 = vadd.f32 %v1167, %v1176
      %v1187 = vadd.f32 %v1168, %v1176
      %v1188 = vadd.f32 %v1169, %v1176
      %v1189 = vadd.f32 %v1170, %v1176
      %v1190 = vadd.f32 %v1171, %v1176
      %v1191 = vadd.f32 %v1172, %v1176
      %v1192 = vadd.f32 %v1173, %v1176
      %v1193 = vadd.f32 %v1174, %v1176
      %v1194 = vxor.u32 %v1178, 2147483648
      %v1195 = vxor.u32 %v1179, 2147483648
      %v1196 = vxor.u32 %v1180, 2147483648
      %v1197 = vxor.u32 %v1181, 2147483648
      %v1198 = vxor.u32 %v1182, 2147483648
      %v1199 = vxor.u32 %v1183, 2147483648
      %v1200 = vxor.u32 %v1184, 2147483648
      %v1201 = vxor.u32 %v1185, 2147483648
      %v1202 = vxor.u32 %v1186, 2147483648
      %v1203 = vxor.u32 %v1187, 2147483648
      %v1204 = vxor.u32 %v1188, 2147483648
      %v1205 = vxor.u32 %v1189, 2147483648
      %v1206 = vxor.u32 %v1190, 2147483648
      %v1207 = vxor.u32 %v1191, 2147483648
      %v1208 = vxor.u32 %v1192, 2147483648
      %v1209 = vxor.u32 %v1193, 2147483648
      %v1210 = vmul.f32 %v1194, 1.442695
      %v1211 = vpow.pop %v1210
      %v1212 = vmul.f32 %v1195, 1.442695
      %v1213 = vpow.pop %v1212
      %v1214 = vmul.f32 %v1196, 1.442695
      %v1215 = vpow.pop %v1214
      %v1216 = vmul.f32 %v1197, 1.442695
      %v1217 = vpow.pop %v1216
      %v1218 = vmul.f32 %v1198, 1.442695
      %v1219 = vpow.pop %v1218
      %v1220 = vmul.f32 %v1199, 1.442695
      %v1221 = vpow.pop %v1220
      %v1222 = vmul.f32 %v1200, 1.442695
      %v1223 = vpow.pop %v1222
      %v1224 = vmul.f32 %v1201, 1.442695
      %v1225 = vpow.pop %v1224
      %v1226 = vmul.f32 %v1202, 1.442695
      %v1227 = vpow.pop %v1226
      %v1228 = vmul.f32 %v1203, 1.442695
      %v1229 = vpow.pop %v1228
      %v1230 = vmul.f32 %v1204, 1.442695
      %v1231 = vpow.pop %v1230
      %v1232 = vmul.f32 %v1205, 1.442695
      %v1233 = vpow.pop %v1232
      %v1234 = vmul.f32 %v1206, 1.442695
      %v1235 = vpow.pop %v1234
      %v1236 = vmul.f32 %v1207, 1.442695
      %v1237 = vpow.pop %v1236
      %v1238 = vmul.f32 %v1208, 1.442695
      %v1239 = vpow.pop %v1238
      %v1240 = vmul.f32 %v1209, 1.442695
      %v1241 = vpow.pop %v1240
      %v1242 = vadd.f32 %v1211, 1.0
      %v1243 = vadd.f32 %v1213, 1.0
      %v1244 = vadd.f32 %v1215, 1.0
      %v1245 = vadd.f32 %v1217, 1.0
      %v1246 = vadd.f32 %v1219, 1.0
      %v1247 = vadd.f32 %v1221, 1.0
      %v1248 = vadd.f32 %v1223, 1.0
      %v1249 = vadd.f32 %v1225, 1.0
      %v1250 = vadd.f32 %v1227, 1.0
      %v1251 = vadd.f32 %v1229, 1.0
      %v1252 = vadd.f32 %v1231, 1.0
      %v1253 = vadd.f32 %v1233, 1.0
      %v1254 = vadd.f32 %v1235, 1.0
      %v1255 = vadd.f32 %v1237, 1.0
      %v1256 = vadd.f32 %v1239, 1.0
      %v1257 = vadd.f32 %v1241, 1.0
      %v1258 = vrcp.pop %v1242
      %v1259 = vmul.f32 %v1242, %v1258
      %v1260 = vsub.f32 1.0, %v1259
      %v1261 = vmul.f32 %v1258, %v1260
      %v1262 = vadd.f32 %v1258, %v1261
      %vm1263 = vweird.f32 %v1242
      %vm1264 = vweird.f32 %v1258
      %vm1265 = vmor %vm1263, %vm1264
      %v1266 = vsel %vm1265, %v1258, %v1262
      %v1267 = vand.u32 2147483647, %v1242
      %vm1268 = vcmp.eq.f32.partialorder %v1267, 8.507059e+37
      %v1269 = vand.u32 %v1242, 2147483648
      %v1270 = vor.u32 1.1754944e-38, %v1269
      %v1271 = vsel %vm1268, %v1270, %v1266
      %v1272 = vmul.f32 1.0, %v1271
      %v1273 = vrcp.pop %v1243
      %v1274 = vmul.f32 %v1243, %v1273
      %v1275 = vsub.f32 1.0, %v1274
      %v1276 = vmul.f32 %v1273, %v1275
      %v1277 = vadd.f32 %v1273, %v1276
      %vm1278 = vweird.f32 %v1243
      %vm1279 = vweird.f32 %v1273
      %vm1280 = vmor %vm1278, %vm1279
      %v1281 = vsel %vm1280, %v1273, %v1277
      %v1282 = vand.u32 2147483647, %v1243
      %vm1283 = vcmp.eq.f32.partialorder %v1282, 8.507059e+37
      %v1284 = vand.u32 %v1243, 2147483648
      %v1285 = vor.u32 1.1754944e-38, %v1284
      %v1286 = vsel %vm1283, %v1285, %v1281
      %v1287 = vmul.f32 1.0, %v1286
      %v1288 = vrcp.pop %v1244
      %v1289 = vmul.f32 %v1244, %v1288
      %v1290 = vsub.f32 1.0, %v1289
      %v1291 = vmul.f32 %v1288, %v1290
      %v1292 = vadd.f32 %v1288, %v1291
      %vm1293 = vweird.f32 %v1244
      %vm1294 = vweird.f32 %v1288
      %vm1295 = vmor %vm1293, %vm1294
      %v1296 = vsel %vm1295, %v1288, %v1292
      %v1297 = vand.u32 2147483647, %v1244
      %vm1298 = vcmp.eq.f32.partialorder %v1297, 8.507059e+37
      %v1299 = vand.u32 %v1244, 2147483648
      %v1300 = vor.u32 1.1754944e-38, %v1299
      %v1301 = vsel %vm1298, %v1300, %v1296
      %v1302 = vmul.f32 1.0, %v1301
      %v1303 = vrcp.pop %v1245
      %v1304 = vmul.f32 %v1245, %v1303
      %v1305 = vsub.f32 1.0, %v1304
      %v1306 = vmul.f32 %v1303, %v1305
      %v1307 = vadd.f32 %v1303, %v1306
      %vm1308 = vweird.f32 %v1245
      %vm1309 = vweird.f32 %v1303
      %vm1310 = vmor %vm1308, %vm1309
      %v1311 = vsel %vm1310, %v1303, %v1307
      %v1312 = vand.u32 2147483647, %v1245
      %vm1313 = vcmp.eq.f32.partialorder %v1312, 8.507059e+37
      %v1314 = vand.u32 %v1245, 2147483648
      %v1315 = vor.u32 1.1754944e-38, %v1314
      %v1316 = vsel %vm1313, %v1315, %v1311
      %v1317 = vmul.f32 1.0, %v1316
      %v1318 = vrcp.pop %v1246
      %v1319 = vmul.f32 %v1246, %v1318
      %v1320 = vsub.f32 1.0, %v1319
      %v1321 = vmul.f32 %v1318, %v1320
      %v1322 = vadd.f32 %v1318, %v1321
      %vm1323 = vweird.f32 %v1246
      %vm1324 = vweird.f32 %v1318
      %vm1325 = vmor %vm1323, %vm1324
      %v1326 = vsel %vm1325, %v1318, %v1322
      %v1327 = vand.u32 2147483647, %v1246
      %vm1328 = vcmp.eq.f32.partialorder %v1327, 8.507059e+37
      %v1329 = vand.u32 %v1246, 2147483648
      %v1330 = vor.u32 1.1754944e-38, %v1329
      %v1331 = vsel %vm1328, %v1330, %v1326
      %v1332 = vmul.f32 1.0, %v1331
      %v1333 = vrcp.pop %v1247
      %v1334 = vmul.f32 %v1247, %v1333
      %v1335 = vsub.f32 1.0, %v1334
      %v1336 = vmul.f32 %v1333, %v1335
      %v1337 = vadd.f32 %v1333, %v1336
      %vm1338 = vweird.f32 %v1247
      %vm1339 = vweird.f32 %v1333
      %vm1340 = vmor %vm1338, %vm1339
      %v1341 = vsel %vm1340, %v1333, %v1337
      %v1342 = vand.u32 2147483647, %v1247
      %vm1343 = vcmp.eq.f32.partialorder %v1342, 8.507059e+37
      %v1344 = vand.u32 %v1247, 2147483648
      %v1345 = vor.u32 1.1754944e-38, %v1344
      %v1346 = vsel %vm1343, %v1345, %v1341
      %v1347 = vmul.f32 1.0, %v1346
      %v1348 = vrcp.pop %v1248
      %v1349 = vmul.f32 %v1248, %v1348
      %v1350 = vsub.f32 1.0, %v1349
      %v1351 = vmul.f32 %v1348, %v1350
      %v1352 = vadd.f32 %v1348, %v1351
      %vm1353 = vweird.f32 %v1248
      %vm1354 = vweird.f32 %v1348
      %vm1355 = vmor %vm1353, %vm1354
      %v1356 = vsel %vm1355, %v1348, %v1352
      %v1357 = vand.u32 2147483647, %v1248
      %vm1358 = vcmp.eq.f32.partialorder %v1357, 8.507059e+37
      %v1359 = vand.u32 %v1248, 2147483648
      %v1360 = vor.u32 1.1754944e-38, %v1359
      %v1361 = vsel %vm1358, %v1360, %v1356
      %v1362 = vmul.f32 1.0, %v1361
      %v1363 = vrcp.pop %v1249
      %v1364 = vmul.f32 %v1249, %v1363
      %v1365 = vsub.f32 1.0, %v1364
      %v1366 = vmul.f32 %v1363, %v1365
      %v1367 = vadd.f32 %v1363, %v1366
      %vm1368 = vweird.f32 %v1249
      %vm1369 = vweird.f32 %v1363
      %vm1370 = vmor %vm1368, %vm1369
      %v1371 = vsel %vm1370, %v1363, %v1367
      %v1372 = vand.u32 2147483647, %v1249
      %vm1373 = vcmp.eq.f32.partialorder %v1372, 8.507059e+37
      %v1374 = vand.u32 %v1249, 2147483648
      %v1375 = vor.u32 1.1754944e-38, %v1374
      %v1376 = vsel %vm1373, %v1375, %v1371
      %v1377 = vmul.f32 1.0, %v1376
      %v1378 = vrcp.pop %v1250
      %v1379 = vmul.f32 %v1250, %v1378
      %v1380 = vsub.f32 1.0, %v1379
      %v1381 = vmul.f32 %v1378, %v1380
      %v1382 = vadd.f32 %v1378, %v1381
      %vm1383 = vweird.f32 %v1250
      %vm1384 = vweird.f32 %v1378
      %vm1385 = vmor %vm1383, %vm1384
      %v1386 = vsel %vm1385, %v1378, %v1382
      %v1387 = vand.u32 2147483647, %v1250
      %vm1388 = vcmp.eq.f32.partialorder %v1387, 8.507059e+37
      %v1389 = vand.u32 %v1250, 2147483648
      %v1390 = vor.u32 1.1754944e-38, %v1389
      %v1391 = vsel %vm1388, %v1390, %v1386
      %v1392 = vmul.f32 1.0, %v1391
      %v1393 = vrcp.pop %v1251
      %v1394 = vmul.f32 %v1251, %v1393
      %v1395 = vsub.f32 1.0, %v1394
      %v1396 = vmul.f32 %v1393, %v1395
      %v1397 = vadd.f32 %v1393, %v1396
      %vm1398 = vweird.f32 %v1251
      %vm1399 = vweird.f32 %v1393
      %vm1400 = vmor %vm1398, %vm1399
      %v1401 = vsel %vm1400, %v1393, %v1397
      %v1402 = vand.u32 2147483647, %v1251
      %vm1403 = vcmp.eq.f32.partialorder %v1402, 8.507059e+37
      %v1404 = vand.u32 %v1251, 2147483648
      %v1405 = vor.u32 1.1754944e-38, %v1404
      %v1406 = vsel %vm1403, %v1405, %v1401
      %v1407 = vmul.f32 1.0, %v1406
      %v1408 = vrcp.pop %v1252
      %v1409 = vmul.f32 %v1252, %v1408
      %v1410 = vsub.f32 1.0, %v1409
      %v1411 = vmul.f32 %v1408, %v1410
      %v1412 = vadd.f32 %v1408, %v1411
      %vm1413 = vweird.f32 %v1252
      %vm1414 = vweird.f32 %v1408
      %vm1415 = vmor %vm1413, %vm1414
      %v1416 = vsel %vm1415, %v1408, %v1412
      %v1417 = vand.u32 2147483647, %v1252
      %vm1418 = vcmp.eq.f32.partialorder %v1417, 8.507059e+37
      %v1419 = vand.u32 %v1252, 2147483648
      %v1420 = vor.u32 1.1754944e-38, %v1419
      %v1421 = vsel %vm1418, %v1420, %v1416
      %v1422 = vmul.f32 1.0, %v1421
      %v1423 = vrcp.pop %v1253
      %v1424 = vmul.f32 %v1253, %v1423
      %v1425 = vsub.f32 1.0, %v1424
      %v1426 = vmul.f32 %v1423, %v1425
      %v1427 = vadd.f32 %v1423, %v1426
      %vm1428 = vweird.f32 %v1253
      %vm1429 = vweird.f32 %v1423
      %vm1430 = vmor %vm1428, %vm1429
      %v1431 = vsel %vm1430, %v1423, %v1427
      %v1432 = vand.u32 2147483647, %v1253
      %vm1433 = vcmp.eq.f32.partialorder %v1432, 8.507059e+37
      %v1434 = vand.u32 %v1253, 2147483648
      %v1435 = vor.u32 1.1754944e-38, %v1434
      %v1436 = vsel %vm1433, %v1435, %v1431
      %v1437 = vmul.f32 1.0, %v1436
      %v1438 = vrcp.pop %v1254
      %v1439 = vmul.f32 %v1254, %v1438
      %v1440 = vsub.f32 1.0, %v1439
      %v1441 = vmul.f32 %v1438, %v1440
      %v1442 = vadd.f32 %v1438, %v1441
      %vm1443 = vweird.f32 %v1254
      %vm1444 = vweird.f32 %v1438
      %vm1445 = vmor %vm1443, %vm1444
      %v1446 = vsel %vm1445, %v1438, %v1442
      %v1447 = vand.u32 2147483647, %v1254
      %vm1448 = vcmp.eq.f32.partialorder %v1447, 8.507059e+37
      %v1449 = vand.u32 %v1254, 2147483648
      %v1450 = vor.u32 1.1754944e-38, %v1449
      %v1451 = vsel %vm1448, %v1450, %v1446
      %v1452 = vmul.f32 1.0, %v1451
      %v1453 = vrcp.pop %v1255
      %v1454 = vmul.f32 %v1255, %v1453
      %v1455 = vsub.f32 1.0, %v1454
      %v1456 = vmul.f32 %v1453, %v1455
      %v1457 = vadd.f32 %v1453, %v1456
      %vm1458 = vweird.f32 %v1255
      %vm1459 = vweird.f32 %v1453
      %vm1460 = vmor %vm1458, %vm1459
      %v1461 = vsel %vm1460, %v1453, %v1457
      %v1462 = vand.u32 2147483647, %v1255
      %vm1463 = vcmp.eq.f32.partialorder %v1462, 8.507059e+37
      %v1464 = vand.u32 %v1255, 2147483648
      %v1465 = vor.u32 1.1754944e-38, %v1464
      %v1466 = vsel %vm1463, %v1465, %v1461
      %v1467 = vmul.f32 1.0, %v1466
      %v1468 = vrcp.pop %v1256
      %v1469 = vmul.f32 %v1256, %v1468
      %v1470 = vsub.f32 1.0, %v1469
      %v1471 = vmul.f32 %v1468, %v1470
      %v1472 = vadd.f32 %v1468, %v1471
      %vm1473 = vweird.f32 %v1256
      %vm1474 = vweird.f32 %v1468
      %vm1475 = vmor %vm1473, %vm1474
      %v1476 = vsel %vm1475, %v1468, %v1472
      %v1477 = vand.u32 2147483647, %v1256
      %vm1478 = vcmp.eq.f32.partialorder %v1477, 8.507059e+37
      %v1479 = vand.u32 %v1256, 2147483648
      %v1480 = vor.u32 1.1754944e-38, %v1479
      %v1481 = vsel %vm1478, %v1480, %v1476
      %v1482 = vmul.f32 1.0, %v1481
      %v1483 = vrcp.pop %v1257
      %v1484 = vmul.f32 %v1257, %v1483
      %v1485 = vsub.f32 1.0, %v1484
      %v1486 = vmul.f32 %v1483, %v1485
      %v1487 = vadd.f32 %v1483, %v1486
      %vm1488 = vweird.f32 %v1257
      %vm1489 = vweird.f32 %v1483
      %vm1490 = vmor %vm1488, %vm1489
      %v1491 = vsel %vm1490, %v1483, %v1487
      %v1492 = vand.u32 2147483647, %v1257
      %vm1493 = vcmp.eq.f32.partialorder %v1492, 8.507059e+37
      %v1494 = vand.u32 %v1257, 2147483648
      %v1495 = vor.u32 1.1754944e-38, %v1494
      %v1496 = vsel %vm1493, %v1495, %v1491
      %v1497 = vmul.f32 1.0, %v1496
      %v1498 = vadd.f32 %v994, %v1176
      %v1499 = vadd.f32 %v997, %v1176
      %v1500 = vadd.f32 %v1000, %v1176
      %v1501 = vadd.f32 %v1003, %v1176
      %v1502 = vadd.f32 %v1006, %v1176
      %v1503 = vadd.f32 %v1009, %v1176
      %v1504 = vadd.f32 %v1012, %v1176
      %v1505 = vadd.f32 %v1015, %v1176
      %v1506 = vadd.f32 %v1018, %v1176
      %v1507 = vadd.f32 %v1021, %v1176
      %v1508 = vadd.f32 %v1024, %v1176
      %v1509 = vadd.f32 %v1027, %v1176
      %v1510 = vadd.f32 %v1030, %v1176
      %v1511 = vadd.f32 %v1033, %v1176
      %v1512 = vadd.f32 %v1036, %v1176
      %v1513 = vadd.f32 %v1039, %v1176
      %1514 = vrot.lane.b32.xlu0 %v1176, 96
      %v1515 = vpop.permute.xlu0 %1514
      %v1517 = vadd.f32 %v1111, %v1515
      %v1518 = vadd.f32 %v1114, %v1515
      %v1519 = vadd.f32 %v1117, %v1515
      %v1520 = vadd.f32 %v1120, %v1515
      %v1521 = vadd.f32 %v1123, %v1515
      %v1522 = vadd.f32 %v1126, %v1515
      %v1523 = vadd.f32 %v1129, %v1515
      %v1524 = vadd.f32 %v1132, %v1515
      %v1525 = vadd.f32 %v1135, %v1515
      %v1526 = vadd.f32 %v1138, %v1515
      %v1527 = vadd.f32 %v1141, %v1515
      %v1528 = vadd.f32 %v1144, %v1515
      %v1529 = vadd.f32 %v1147, %v1515
      %v1530 = vadd.f32 %v1150, %v1515
      %v1531 = vadd.f32 %v1153, %v1515
      %v1532 = vadd.f32 %v1156, %v1515
      %1549 = vrot.lane.b32.xlu0 %v1517, 64
      %v1550 = vpop.permute.xlu0 %1549
      %1551 = vrot.lane.b32.xlu0 %v1518, 64
      %v1552 = vpop.permute.xlu0 %1551
      %1553 = vrot.lane.b32.xlu0 %v1519, 64
      %v1554 = vpop.permute.xlu0 %1553
      %1555 = vrot.lane.b32.xlu0 %v1520, 64
      %v1556 = vpop.permute.xlu0 %1555
      %1557 = vrot.lane.b32.xlu0 %v1521, 64
      %v1558 = vpop.permute.xlu0 %1557
      %1559 = vrot.lane.b32.xlu0 %v1522, 64
      %v1560 = vpop.permute.xlu0 %1559
      %1561 = vrot.lane.b32.xlu0 %v1523, 64
      %v1562 = vpop.permute.xlu0 %1561
      %1563 = vrot.lane.b32.xlu0 %v1524, 64
      %v1564 = vpop.permute.xlu0 %1563
      %1565 = vrot.lane.b32.xlu0 %v1525, 64
      %v1566 = vpop.permute.xlu0 %1565
      %1567 = vrot.lane.b32.xlu0 %v1526, 64
      %v1568 = vpop.permute.xlu0 %1567
      %1569 = vrot.lane.b32.xlu0 %v1527, 64
      %v1570 = vpop.permute.xlu0 %1569
      %1571 = vrot.lane.b32.xlu0 %v1528, 64
      %v1572 = vpop.permute.xlu0 %1571
      %1573 = vrot.lane.b32.xlu0 %v1529, 64
      %v1574 = vpop.permute.xlu0 %1573
      %1575 = vrot.lane.b32.xlu0 %v1530, 64
      %v1576 = vpop.permute.xlu0 %1575
      %1577 = vrot.lane.b32.xlu0 %v1531, 64
      %v1578 = vpop.permute.xlu0 %1577
      %1579 = vrot.lane.b32.xlu0 %v1532, 64
      %v1580 = vpop.permute.xlu0 %1579
      %v1597 = vmul.f32 %v1272, %v1550
      %v1598 = vmul.f32 %v1287, %v1552
      %v1599 = vmul.f32 %v1302, %v1554
      %v1600 = vmul.f32 %v1317, %v1556
      %v1601 = vmul.f32 %v1332, %v1558
      %v1602 = vmul.f32 %v1347, %v1560
      %v1603 = vmul.f32 %v1362, %v1562
      %v1604 = vmul.f32 %v1377, %v1564
      %v1605 = vmul.f32 %v1392, %v1566
      %v1606 = vmul.f32 %v1407, %v1568
      %v1607 = vmul.f32 %v1422, %v1570
      %v1608 = vmul.f32 %v1437, %v1572
      %v1609 = vmul.f32 %v1452, %v1574
      %v1610 = vmul.f32 %v1467, %v1576
      %v1611 = vmul.f32 %v1482, %v1578
      %v1612 = vmul.f32 %v1497, %v1580
      %1629 = vrot.lane.b32.xlu0 %v1597, 64
      %v1630 = vpop.permute.xlu0 %1629
      %1631 = vrot.lane.b32.xlu0 %v1598, 64
      %v1632 = vpop.permute.xlu0 %1631
      %1633 = vrot.lane.b32.xlu0 %v1599, 64
      %v1634 = vpop.permute.xlu0 %1633
      %1635 = vrot.lane.b32.xlu0 %v1600, 64
      %v1636 = vpop.permute.xlu0 %1635
      %1637 = vrot.lane.b32.xlu0 %v1601, 64
      %v1638 = vpop.permute.xlu0 %1637
      %1639 = vrot.lane.b32.xlu0 %v1602, 64
      %v1640 = vpop.permute.xlu0 %1639
      %1641 = vrot.lane.b32.xlu0 %v1603, 64
      %v1642 = vpop.permute.xlu0 %1641
      %1643 = vrot.lane.b32.xlu0 %v1604, 64
      %v1644 = vpop.permute.xlu0 %1643
      %1645 = vrot.lane.b32.xlu0 %v1605, 64
      %v1646 = vpop.permute.xlu0 %1645
      %1647 = vrot.lane.b32.xlu0 %v1606, 64
      %v1648 = vpop.permute.xlu0 %1647
      %1649 = vrot.lane.b32.xlu0 %v1607, 64
      %v1650 = vpop.permute.xlu0 %1649
      %1651 = vrot.lane.b32.xlu0 %v1608, 64
      %v1652 = vpop.permute.xlu0 %1651
      %1653 = vrot.lane.b32.xlu0 %v1609, 64
      %v1654 = vpop.permute.xlu0 %1653
      %1655 = vrot.lane.b32.xlu0 %v1610, 64
      %v1656 = vpop.permute.xlu0 %1655
      %1657 = vrot.lane.b32.xlu0 %v1611, 64
      %v1658 = vpop.permute.xlu0 %1657
      %1659 = vrot.lane.b32.xlu0 %v1612, 64
      %v1660 = vpop.permute.xlu0 %1659
      %v1677 = vadd.f32 %v1498, %v1630
      %v1678 = vadd.f32 %v1499, %v1632
      %v1679 = vadd.f32 %v1500, %v1634
      %v1680 = vadd.f32 %v1501, %v1636
      %v1681 = vadd.f32 %v1502, %v1638
      %v1682 = vadd.f32 %v1503, %v1640
      %v1683 = vadd.f32 %v1504, %v1642
      %v1684 = vadd.f32 %v1505, %v1644
      %v1685 = vadd.f32 %v1506, %v1646
      %v1686 = vadd.f32 %v1507, %v1648
      %v1687 = vadd.f32 %v1508, %v1650
      %v1688 = vadd.f32 %v1509, %v1652
      %v1689 = vadd.f32 %v1510, %v1654
      %v1690 = vadd.f32 %v1511, %v1656
      %v1691 = vadd.f32 %v1512, %v1658
      %v1692 = vadd.f32 %v1513, %v1660
      %v1693 = vtanh.pop %v1677
      %v1694 = vtanh.pop %v1678
      %v1695 = vtanh.pop %v1679
      %v1696 = vtanh.pop %v1680
      %v1697 = vtanh.pop %v1681
      %v1698 = vtanh.pop %v1682
      %v1699 = vtanh.pop %v1683
      %v1700 = vtanh.pop %v1684
      %v1701 = vtanh.pop %v1685
      %v1702 = vtanh.pop %v1686
      %v1703 = vtanh.pop %v1687
      %v1704 = vtanh.pop %v1688
      %v1705 = vtanh.pop %v1689
      %v1706 = vtanh.pop %v1690
      %v1707 = vtanh.pop %v1691
      %v1708 = vtanh.pop %v1692
      %1725 = vrot.lane.b32.xlu0 %v1693, 64
      %v1726 = vpop.permute.xlu0 %1725
      %1727 = vrot.lane.b32.xlu0 %v1694, 64
      %v1728 = vpop.permute.xlu0 %1727
      %1729 = vrot.lane.b32.xlu0 %v1695, 64
      %v1730 = vpop.permute.xlu0 %1729
      %1731 = vrot.lane.b32.xlu0 %v1696, 64
      %v1732 = vpop.permute.xlu0 %1731
      %1733 = vrot.lane.b32.xlu0 %v1697, 64
      %v1734 = vpop.permute.xlu0 %1733
      %1735 = vrot.lane.b32.xlu0 %v1698, 64
      %v1736 = vpop.permute.xlu0 %1735
      %1737 = vrot.lane.b32.xlu0 %v1699, 64
      %v1738 = vpop.permute.xlu0 %1737
      %1739 = vrot.lane.b32.xlu0 %v1700, 64
      %v1740 = vpop.permute.xlu0 %1739
      %1741 = vrot.lane.b32.xlu0 %v1701, 64
      %v1742 = vpop.permute.xlu0 %1741
      %1743 = vrot.lane.b32.xlu0 %v1702, 64
      %v1744 = vpop.permute.xlu0 %1743
      %1745 = vrot.lane.b32.xlu0 %v1703, 64
      %v1746 = vpop.permute.xlu0 %1745
      %1747 = vrot.lane.b32.xlu0 %v1704, 64
      %v1748 = vpop.permute.xlu0 %1747
      %1749 = vrot.lane.b32.xlu0 %v1705, 64
      %v1750 = vpop.permute.xlu0 %1749
      %1751 = vrot.lane.b32.xlu0 %v1706, 64
      %v1752 = vpop.permute.xlu0 %1751
      %1753 = vrot.lane.b32.xlu0 %v1707, 64
      %v1754 = vpop.permute.xlu0 %1753
      %1755 = vrot.lane.b32.xlu0 %v1708, 64
      %v1756 = vpop.permute.xlu0 %1755
      %v1773 = vsub.f32 %v908, %v1726
      %v1774 = vsub.f32 %v909, %v1728
      %v1775 = vsub.f32 %v910, %v1730
      %v1776 = vsub.f32 %v911, %v1732
      %v1777 = vsub.f32 %v912, %v1734
      %v1778 = vsub.f32 %v913, %v1736
      %v1779 = vsub.f32 %v914, %v1738
      %v1780 = vsub.f32 %v915, %v1740
      %v1781 = vsub.f32 %v916, %v1742
      %v1782 = vsub.f32 %v917, %v1744
      %v1783 = vsub.f32 %v918, %v1746
      %v1784 = vsub.f32 %v919, %v1748
      %v1785 = vsub.f32 %v920, %v1750
      %v1786 = vsub.f32 %v921, %v1752
      %v1787 = vsub.f32 %v922, %v1754
      %v1788 = vsub.f32 %v923, %v1756
      %1805 = vrot.lane.b32.xlu0 %v1773, 32
      %v1806 = vpop.permute.xlu0 %1805
      %1807 = vrot.lane.b32.xlu0 %v1774, 32
      %v1808 = vpop.permute.xlu0 %1807
      %1809 = vrot.lane.b32.xlu0 %v1775, 32
      %v1810 = vpop.permute.xlu0 %1809
      %1811 = vrot.lane.b32.xlu0 %v1776, 32
      %v1812 = vpop.permute.xlu0 %1811
      %1813 = vrot.lane.b32.xlu0 %v1777, 32
      %v1814 = vpop.permute.xlu0 %1813
      %1815 = vrot.lane.b32.xlu0 %v1778, 32
      %v1816 = vpop.permute.xlu0 %1815
      %1817 = vrot.lane.b32.xlu0 %v1779, 32
      %v1818 = vpop.permute.xlu0 %1817
      %1819 = vrot.lane.b32.xlu0 %v1780, 32
      %v1820 = vpop.permute.xlu0 %1819
      %1821 = vrot.lane.b32.xlu0 %v1781, 32
      %v1822 = vpop.permute.xlu0 %1821
      %1823 = vrot.lane.b32.xlu0 %v1782, 32
      %v1824 = vpop.permute.xlu0 %1823
      %1825 = vrot.lane.b32.xlu0 %v1783, 32
      %v1826 = vpop.permute.xlu0 %1825
      %1827 = vrot.lane.b32.xlu0 %v1784, 32
      %v1828 = vpop.permute.xlu0 %1827
      %1829 = vrot.lane.b32.xlu0 %v1785, 32
      %v1830 = vpop.permute.xlu0 %1829
      %1831 = vrot.lane.b32.xlu0 %v1786, 32
      %v1832 = vpop.permute.xlu0 %1831
      %1833 = vrot.lane.b32.xlu0 %v1787, 32
      %v1834 = vpop.permute.xlu0 %1833
      %1835 = vrot.lane.b32.xlu0 %v1788, 32
      %v1836 = vpop.permute.xlu0 %1835
      %v1853 = vmul.f32 %v1272, %v1806
      %v1854 = vmul.f32 %v1287, %v1808
      %v1855 = vmul.f32 %v1302, %v1810
      %v1856 = vmul.f32 %v1317, %v1812
      %v1857 = vmul.f32 %v1332, %v1814
      %v1858 = vmul.f32 %v1347, %v1816
      %v1859 = vmul.f32 %v1362, %v1818
      %v1860 = vmul.f32 %v1377, %v1820
      %v1861 = vmul.f32 %v1392, %v1822
      %v1862 = vmul.f32 %v1407, %v1824
      %v1863 = vmul.f32 %v1422, %v1826
      %v1864 = vmul.f32 %v1437, %v1828
      %v1865 = vmul.f32 %v1452, %v1830
      %v1866 = vmul.f32 %v1467, %v1832
      %v1867 = vmul.f32 %v1482, %v1834
      %v1868 = vmul.f32 %v1497, %v1836
      %1869 = vrot.lane.b32.xlu0 %v1693, 96
      %v1870 = vpop.permute.xlu0 %1869
      %1871 = vrot.lane.b32.xlu0 %v1694, 96
      %v1872 = vpop.permute.xlu0 %1871
      %1873 = vrot.lane.b32.xlu0 %v1695, 96
      %v1874 = vpop.permute.xlu0 %1873
      %1875 = vrot.lane.b32.xlu0 %v1696, 96
      %v1876 = vpop.permute.xlu0 %1875
      %1877 = vrot.lane.b32.xlu0 %v1697, 96
      %v1878 = vpop.permute.xlu0 %1877
      %1879 = vrot.lane.b32.xlu0 %v1698, 96
      %v1880 = vpop.permute.xlu0 %1879
      %1881 = vrot.lane.b32.xlu0 %v1699, 96
      %v1882 = vpop.permute.xlu0 %1881
      %1883 = vrot.lane.b32.xlu0 %v1700, 96
      %v1884 = vpop.permute.xlu0 %1883
      %1885 = vrot.lane.b32.xlu0 %v1701, 96
      %v1886 = vpop.permute.xlu0 %1885
      %1887 = vrot.lane.b32.xlu0 %v1702, 96
      %v1888 = vpop.permute.xlu0 %1887
      %1889 = vrot.lane.b32.xlu0 %v1703, 96
      %v1890 = vpop.permute.xlu0 %1889
      %1891 = vrot.lane.b32.xlu0 %v1704, 96
      %v1892 = vpop.permute.xlu0 %1891
      %1893 = vrot.lane.b32.xlu0 %v1705, 96
      %v1894 = vpop.permute.xlu0 %1893
      %1895 = vrot.lane.b32.xlu0 %v1706, 96
      %v1896 = vpop.permute.xlu0 %1895
      %1897 = vrot.lane.b32.xlu0 %v1707, 96
      %v1898 = vpop.permute.xlu0 %1897
      %1899 = vrot.lane.b32.xlu0 %v1708, 96
      %v1900 = vpop.permute.xlu0 %1899
      %v1917 = vadd.f32 %v1853, %v1870
      %v1918 = vadd.f32 %v1854, %v1872
      %v1919 = vadd.f32 %v1855, %v1874
      %v1920 = vadd.f32 %v1856, %v1876
      %v1921 = vadd.f32 %v1857, %v1878
      %v1922 = vadd.f32 %v1858, %v1880
      %v1923 = vadd.f32 %v1859, %v1882
      %v1924 = vadd.f32 %v1860, %v1884
      %v1925 = vadd.f32 %v1861, %v1886
      %v1926 = vadd.f32 %v1862, %v1888
      %v1927 = vadd.f32 %v1863, %v1890
      %v1928 = vadd.f32 %v1864, %v1892
      %v1929 = vadd.f32 %v1865, %v1894
      %v1930 = vadd.f32 %v1866, %v1896
      %v1931 = vadd.f32 %v1867, %v1898
      %v1932 = vadd.f32 %v1868, %v1900
      %v1933 = vld [vmem:[%s7] sm:$0xff]
      %v1934 = vld [vmem:[%s7 + $0x8] sm:$0xff]
      %v1935 = vld [vmem:[%s7 + $0x10] sm:$0xff]
      %v1936 = vld [vmem:[%s7 + $0x18] sm:$0xff]
      %v1937 = vld [vmem:[%s8] sm:$0x1]
      %v1939 = vperm.slane %v1937, 0
      %1957 = vrot.lane.b32.xlu0 %v1917, 96
      %v1958 = vpop.permute.xlu0 %1957
      %1959 = vrot.lane.b32.xlu0 %v1918, 96
      %v1960 = vpop.permute.xlu0 %1959
      %1961 = vrot.lane.b32.xlu0 %v1919, 96
      %v1962 = vpop.permute.xlu0 %1961
      %1963 = vrot.lane.b32.xlu0 %v1920, 96
      %v1964 = vpop.permute.xlu0 %1963
      %1965 = vrot.lane.b32.xlu0 %v1921, 96
      %v1966 = vpop.permute.xlu0 %1965
      %1967 = vrot.lane.b32.xlu0 %v1922, 96
      %v1968 = vpop.permute.xlu0 %1967
      %1969 = vrot.lane.b32.xlu0 %v1923, 96
      %v1970 = vpop.permute.xlu0 %1969
      %1971 = vrot.lane.b32.xlu0 %v1924, 96
      %v1972 = vpop.permute.xlu0 %1971
      %1973 = vrot.lane.b32.xlu0 %v1925, 96
      %v1974 = vpop.permute.xlu0 %1973
      %1975 = vrot.lane.b32.xlu0 %v1926, 96
      %v1976 = vpop.permute.xlu0 %1975
      %1977 = vrot.lane.b32.xlu0 %v1927, 96
      %v1978 = vpop.permute.xlu0 %1977
      %1979 = vrot.lane.b32.xlu0 %v1928, 96
      %v1980 = vpop.permute.xlu0 %1979
      %1981 = vrot.lane.b32.xlu0 %v1929, 96
      %v1982 = vpop.permute.xlu0 %1981
      %1983 = vrot.lane.b32.xlu0 %v1930, 96
      %v1984 = vpop.permute.xlu0 %1983
      %1985 = vrot.lane.b32.xlu0 %v1931, 96
      %v1986 = vpop.permute.xlu0 %1985
      %1987 = vrot.lane.b32.xlu0 %v1932, 96
      %v1988 = vpop.permute.xlu0 %1987
      %v1989 = vsel %vm496, %v1958, 0
      %v1991 = vsel %vm496, %v1960, 0
      %v1993 = vsel %vm496, %v1962, 0
      %v1995 = vsel %vm496, %v1964, 0
      %v1997 = vsel %vm496, %v1966, 0
      %v1999 = vsel %vm496, %v1968, 0
      %v2001 = vsel %vm496, %v1970, 0
      %v2003 = vsel %vm496, %v1972, 0
      %v2005 = vsel %vm496, %v1974, 0
      %v2007 = vsel %vm496, %v1976, 0
      %v2009 = vsel %vm496, %v1978, 0
      %v2011 = vsel %vm496, %v1980, 0
      %v2013 = vsel %vm496, %v1982, 0
      %v2015 = vsel %vm496, %v1984, 0
      %v2017 = vsel %vm496, %v1986, 0
      %v2019 = vsel %vm496, %v1988, 0
      %2021 = vmatpush.msra.mxu0 0.0
      %2022 = vmatpush.msra.mxu0 0.0
      %2023 = vmatpush.msra.mxu0 0.0
      %2024 = vmatpush.msra.mxu0 0.0
      %2025 = vmatpush.msra.mxu0 0.0
      %2026 = vmatpush.msra.mxu0 0.0
      %2027 = vmatpush.msra.mxu0 0.0
      %2028 = vmatpush.msra.mxu0 0.0
      %2029 = vmatpush.msra.mxu0 0.0
      %2030 = vmatpush.msra.mxu0 0.0
      %2031 = vmatpush.msra.mxu0 0.0
      %2032 = vmatpush.msra.mxu0 0.0
      %2033 = vmatpush.msra.mxu0 %v1936
      %2034 = vmatpush.msra.mxu0 %v1935
      %2035 = vmatpush.msra.mxu0 %v1934
      %2036 = vmatpush.msra.mxu0 %v1933
      %2037 = vmatmul.f32.gmra.mxu0 %v1989
      %v2038 = vpop.f32.mrf.mxu0
      %v2039 = vadd.f32 %v1939, %v2038
      %2040 = vmatmul.f32.gmra.mxu0 %v1991
      %v2041 = vpop.f32.mrf.mxu0
      %v2042 = vadd.f32 %v1939, %v2041
      %2043 = vmatmul.f32.gmra.mxu0 %v1993
      %v2044 = vpop.f32.mrf.mxu0
      %v2045 = vadd.f32 %v1939, %v2044
      %2046 = vmatmul.f32.gmra.mxu0 %v1995
      %v2047 = vpop.f32.mrf.mxu0
      %v2048 = vadd.f32 %v1939, %v2047
      %2049 = vmatmul.f32.gmra.mxu0 %v1997
      %v2050 = vpop.f32.mrf.mxu0
      %v2051 = vadd.f32 %v1939, %v2050
      %2052 = vmatmul.f32.gmra.mxu0 %v1999
      %v2053 = vpop.f32.mrf.mxu0
      %v2054 = vadd.f32 %v1939, %v2053
      %2055 = vmatmul.f32.gmra.mxu0 %v2001
      %v2056 = vpop.f32.mrf.mxu0
      %v2057 = vadd.f32 %v1939, %v2056
      %2058 = vmatmul.f32.gmra.mxu0 %v2003
      %v2059 = vpop.f32.mrf.mxu0
      %v2060 = vadd.f32 %v1939, %v2059
      %2061 = vmatmul.f32.gmra.mxu0 %v2005
      %v2062 = vpop.f32.mrf.mxu0
      %v2063 = vadd.f32 %v1939, %v2062
      %2064 = vmatmul.f32.gmra.mxu0 %v2007
      %v2065 = vpop.f32.mrf.mxu0
      %v2066 = vadd.f32 %v1939, %v2065
      %2067 = vmatmul.f32.gmra.mxu0 %v2009
      %v2068 = vpop.f32.mrf.mxu0
      %v2069 = vadd.f32 %v1939, %v2068
      %2070 = vmatmul.f32.gmra.mxu0 %v2011
      %v2071 = vpop.f32.mrf.mxu0
      %v2072 = vadd.f32 %v1939, %v2071
      %2073 = vmatmul.f32.gmra.mxu0 %v2013
      %v2074 = vpop.f32.mrf.mxu0
      %v2075 = vadd.f32 %v1939, %v2074
      %2076 = vmatmul.f32.gmra.mxu0 %v2015
      %v2077 = vpop.f32.mrf.mxu0
      %v2078 = vadd.f32 %v1939, %v2077
      %2079 = vmatmul.f32.gmra.mxu0 %v2017
      %v2080 = vpop.f32.mrf.mxu0
      %v2081 = vadd.f32 %v1939, %v2080
      %2082 = vmatmul.f32.gmra.mxu0 %v2019
      %v2083 = vpop.f32.mrf.mxu0
      %v2084 = vadd.f32 %v1939, %v2083
      %2085 = vdwg.mxu0
      %2086 = vrot.lane.b32.xlu0 %v1917, 112
      %v2087 = vpop.permute.xlu0 %2086
      %2088 = vrot.lane.b32.xlu0 %v1918, 112
      %v2089 = vpop.permute.xlu0 %2088
      %2090 = vrot.lane.b32.xlu0 %v1919, 112
      %v2091 = vpop.permute.xlu0 %2090
      %2092 = vrot.lane.b32.xlu0 %v1920, 112
      %v2093 = vpop.permute.xlu0 %2092
      %2094 = vrot.lane.b32.xlu0 %v1921, 112
      %v2095 = vpop.permute.xlu0 %2094
      %2096 = vrot.lane.b32.xlu0 %v1922, 112
      %v2097 = vpop.permute.xlu0 %2096
      %2098 = vrot.lane.b32.xlu0 %v1923, 112
      %v2099 = vpop.permute.xlu0 %2098
      %2100 = vrot.lane.b32.xlu0 %v1924, 112
      %v2101 = vpop.permute.xlu0 %2100
      %2102 = vrot.lane.b32.xlu0 %v1925, 112
      %v2103 = vpop.permute.xlu0 %2102
      %2104 = vrot.lane.b32.xlu0 %v1926, 112
      %v2105 = vpop.permute.xlu0 %2104
      %2106 = vrot.lane.b32.xlu0 %v1927, 112
      %v2107 = vpop.permute.xlu0 %2106
      %2108 = vrot.lane.b32.xlu0 %v1928, 112
      %v2109 = vpop.permute.xlu0 %2108
      %2110 = vrot.lane.b32.xlu0 %v1929, 112
      %v2111 = vpop.permute.xlu0 %2110
      %2112 = vrot.lane.b32.xlu0 %v1930, 112
      %v2113 = vpop.permute.xlu0 %2112
      %2114 = vrot.lane.b32.xlu0 %v1931, 112
      %v2115 = vpop.permute.xlu0 %2114
      %2116 = vrot.lane.b32.xlu0 %v1932, 112
      %v2117 = vpop.permute.xlu0 %2116
      %vm2134 = vcmask 130048
      %v2135 = vsel %vm2134, %v2039, %v2087
      %v2136 = vsel %vm2134, %v2042, %v2089
      %v2137 = vsel %vm2134, %v2045, %v2091
      %v2138 = vsel %vm2134, %v2048, %v2093
      %v2139 = vsel %vm2134, %v2051, %v2095
      %v2140 = vsel %vm2134, %v2054, %v2097
      %v2141 = vsel %vm2134, %v2057, %v2099
      %v2142 = vsel %vm2134, %v2060, %v2101
      %v2143 = vsel %vm2134, %v2063, %v2103
      %v2144 = vsel %vm2134, %v2066, %v2105
      %v2145 = vsel %vm2134, %v2069, %v2107
      %v2146 = vsel %vm2134, %v2072, %v2109
      %v2147 = vsel %vm2134, %v2075, %v2111
      %v2148 = vsel %vm2134, %v2078, %v2113
      %v2149 = vsel %vm2134, %v2081, %v2115
      %v2150 = vsel %vm2134, %v2084, %v2117
      %vm2151 = vcmask 392192
      %2152 = vst.msk [vmem:[%s356] sm:$0xff] %vm2151, %v2135
      %2153 = vst.msk [vmem:[%s356 + $0x8] sm:$0xff] %vm2151, %v2136
      %2154 = vst.msk [vmem:[%s356 + $0x10] sm:$0xff] %vm2151, %v2137
      %2155 = vst.msk [vmem:[%s356 + $0x18] sm:$0xff] %vm2151, %v2138
      %2156 = vst.msk [vmem:[%s356 + $0x20] sm:$0xff] %vm2151, %v2139
      %2157 = vst.msk [vmem:[%s356 + $0x28] sm:$0xff] %vm2151, %v2140
      %2158 = vst.msk [vmem:[%s356 + $0x30] sm:$0xff] %vm2151, %v2141
      %2159 = vst.msk [vmem:[%s356 + $0x38] sm:$0xff] %vm2151, %v2142
      %2160 = vst.msk [vmem:[%s356 + $0x40] sm:$0xff] %vm2151, %v2143
      %2161 = vst.msk [vmem:[%s356 + $0x48] sm:$0xff] %vm2151, %v2144
      %2162 = vst.msk [vmem:[%s356 + $0x50] sm:$0xff] %vm2151, %v2145
      %2163 = vst.msk [vmem:[%s356 + $0x58] sm:$0xff] %vm2151, %v2146
      %2164 = vst.msk [vmem:[%s356 + $0x60] sm:$0xff] %vm2151, %v2147
      %2165 = vst.msk [vmem:[%s356 + $0x68] sm:$0xff] %vm2151, %v2148
      %2166 = vst.msk [vmem:[%s356 + $0x70] sm:$0xff] %vm2151, %v2149
      %2167 = vst.msk [vmem:[%s356 + $0x78] sm:$0xff] %vm2151, %v2150
      %s2168 = smul.u32 16, %s20
      %p2169 = scmp.lt.s32.totalorder %s2168, 31
      %s2170 = scalar_select %p2169, %s2168, 31
      %s2171 = smul.addr %s2170, 8
      %s2172 = scalar_lea.vmem %s9, %s2171
      // Predicated region
      $region57: #{tpu_custom_call.1} parent=55 // pred_check
        %p2173 = pneg %p237
      $region58: #{tpu_custom_call.1} parent=55 // pred_check_branch
        %2175 = sbr.rel (%p2173) target = $region60
      $region59: #{tpu_custom_call.1} parent=55 // pred_region
        %s2176 = smul.u32 16, %s20
      $region60: #{tpu_custom_call.1} parent=55 // pred_fallthru
        _
    $region56: #{tpu_custom_call.1} parent=5 // pred_fallthru
      _
    %p2177 = scmp.le.s32.totalorder 2, %s15
    // Predicated region
    $region61: #{tpu_custom_call.1} parent=5 // pred_check
      %p2178 = pneg %p2177
    $region62: #{tpu_custom_call.1} parent=5 // pred_check_branch
      %2180 = sbr.rel (%p2178) target = $region64
    $region63: #{tpu_custom_call.1} parent=5 // pred_region
      %s2181 = ssub.s32 %s15, 2
      // Predicated region
      $region65: #{tpu_custom_call.1} parent=63 // pred_check
        %p2182 = pneg %p243
      $region66: #{tpu_custom_call.1} parent=63 // pred_check_branch
        %2184 = sbr.rel (%p2182) target = $region68
      $region67: #{tpu_custom_call.1} parent=63 // pred_region
        %s2185 = smul.u32 16, %s21
        %p2186 = scmp.lt.s32.totalorder %s2185, 31
        %s2187 = scalar_select %p2186, %s2185, 31
        %s2188 = smul.addr %s2187, 8
        %s2189 = scalar_lea.vmem %s9, %s2188
      $region68: #{tpu_custom_call.1} parent=63 // pred_fallthru
        _
    $region64: #{tpu_custom_call.1} parent=5 // pred_fallthru
      _
  $region6: #{tpu_custom_call.1} parent=0 // loop_footer
    %s19 = sadd.s32 1, %s15
  $region7: #{tpu_custom_call.1} parent=0 // loop_footer_branch
    %14 = sbr.rel target = $region3
  $region8: #{tpu_custom_call.1} parent=0 // loop_exit
    _

</llo_original>
